<compile_context>
chip_gen: v5e
topology: v5e:2x2
jax: 0.10.0
libtpu: 0.0.40
codegen_flags: <defaults>
</compile_context>

<pallas_src>
import functools

import jax
import jax.numpy as jnp
from jax import lax
from jax.experimental import pallas as pl
from jax.experimental.pallas import tpu as pltpu


STATE_SIZE = 37
ACTION_SIZE = 4

# conv output lengths (VALID padding, PyTorch defaults)
L1 = (STATE_SIZE - 7) // 2 + 1   # 16
L2 = (L1 - 4) // 2 + 1           # 7
L3 = (L2 - 3) // 1 + 1           # 5
C1, C2, C3 = 32, 64, 64
W1_COLS = L1 * C1                # 512
W2_COLS = L2 * C2                # 448
W3_COLS = L3 * C3                # 320  == FLAT
FLAT = C3 * L3                   # 320
HIDDEN = 512
OUT_PAD = 128                    # lane-dense padded output width
K1_PAD = 64                      # first-layer K padded 37 -> 64 (contiguous rows)

# packed-bias layout: 128-aligned segment starts inside one (1, B_TOTAL) array
B1_OFF, B2_OFF, B3_OFF, BD_OFF, BO_OFF = 0, 512, 1024, 1408, 1920
B_TOTAL = 2048


def _round_up(x, m):
    return (x + m - 1) // m * m


def _choose_bm(batch, block_b):
    """Batch block: multiple of 8, <= padded batch, >=2 grid steps when possible."""
    bp8 = _round_up(batch, 8)
    bm = min(_round_up(block_b, 8), bp8)
    if bp8 >= 16:
        # guarantee at least 2 grid steps so ("parallel",) can use both v7x TCs
        half = _round_up(-(-bp8 // 2), 8)
        bm = min(bm, half)
    return max(bm, 8)


# ----------------------------------------------------------------------------
# Kernel: 5 fused matmuls, bf16 operands/activations, f32 accumulate/bias/ReLU.
# ----------------------------------------------------------------------------
def qnet_kernel(x_ref, w1_ref, w2_ref, w3_ref, wd_ref, wo_ref, b_ref, o_ref):
    x = x_ref[...].astype(jnp.bfloat16)                       # (bm, 64)

    # conv1 as banded matmul -> position-major (l*32 + c)
    a1 = jnp.dot(x, w1_ref[...], preferred_element_type=jnp.float32)
    a1 = jnp.maximum(a1 + b_ref[:, B1_OFF:B1_OFF + W1_COLS],
                     0.0).astype(jnp.bfloat16)                 # (bm, 512) bf16

    # conv2 as banded matmul -> (l*64 + c)
    a2 = jnp.dot(a1, w2_ref[...], preferred_element_type=jnp.float32)
    a2 = jnp.maximum(a2 + b_ref[:, B2_OFF:B2_OFF + W2_COLS],
                     0.0).astype(jnp.bfloat16)                 # (bm, 448) bf16

    # conv3 as banded matmul -> (l*64 + c)  (this IS the flatten, no concat)
    a3 = jnp.dot(a2, w3_ref[...], preferred_element_type=jnp.float32)
    a3 = jnp.maximum(a3 + b_ref[:, B3_OFF:B3_OFF + W3_COLS],
                     0.0).astype(jnp.bfloat16)                 # (bm, 320) bf16

    # dense1 (weight pre-permuted to position-major input layout)
    h = jnp.dot(a3, wd_ref[...], preferred_element_type=jnp.float32)
    h = jnp.maximum(h + b_ref[:, BD_OFF:BD_OFF + HIDDEN],
                    0.0).astype(jnp.bfloat16)                  # (bm, 512) bf16

    # out (padded to 128 lanes for a lane-dense, unmasked bf16 store)
    o = jnp.dot(h, wo_ref[...], preferred_element_type=jnp.float32)
    o_ref[...] = (o + b_ref[:, BO_OFF:BO_OFF + OUT_PAD]).astype(jnp.bfloat16)


# ----------------------------------------------------------------------------
# One-time host-side weight preparation (hoisted out of the forward path).
# ----------------------------------------------------------------------------
def prepare_params(params):
    """Build banded/permuted bf16 weights + packed f32 biases from PyTorch-shaped params."""
    (w1, b1, w2, b2, w3, b3, wd, bd, wo, bo) = [jnp.asarray(p, jnp.float32)
                                                for p in params]

    w1t = jnp.transpose(w1[:, 0, :], (1, 0))          # (7, 32)   [k, cout]
    w2t = jnp.transpose(w2, (2, 1, 0))                # (4, 32, 64)
    w3t = jnp.transpose(w3, (2, 1, 0))                # (3, 64, 64)

    # conv1 band: rows = input position (padded to 64), cols = (out_pos*32 + cout)
    W1 = jnp.zeros((K1_PAD, W1_COLS), jnp.float32)
    for t in range(L1):
        for k in range(7):
            W1 = W1.at[2 * t + k, t * C1:(t + 1) * C1].set(w1t[k])

    # conv2 band: rows = (in_pos*32 + cin), cols = (out_pos*64 + cout)
    W2 = jnp.zeros((W1_COLS, W2_COLS), jnp.float32)
    for t in range(L2):
        for k in range(4):
            r = (2 * t + k) * C1
            W2 = W2.at[r:r + C1, t * C2:(t + 1) * C2].set(w2t[k])

    # conv3 band (stride 1)
    W3 = jnp.zeros((W2_COLS, W3_COLS), jnp.float32)
    for t in range(L3):
        for k in range(3):
            r = (t + k) * C2
            W3 = W3.at[r:r + C2, t * C3:(t + 1) * C3].set(w3t[k])

    # dense1: permute input axis from PyTorch channel-major (c*5+l) to the
    # kernel's position-major (l*64+c), then transpose to (in, out).
    wd_perm = jnp.transpose(wd.reshape(HIDDEN, C3, L3), (0, 2, 1)).reshape(HIDDEN, FLAT)
    Wd = jnp.transpose(wd_perm, (1, 0))               # (320, 512)

    # output layer: (512, action) transposed + zero-padded to 128 lanes
    Wo = jnp.zeros((HIDDEN, OUT_PAD), jnp.float32)
    Wo = Wo.at[:, :ACTION_SIZE].set(jnp.transpose(wo, (1, 0)))

    # all biases packed into one pinned operand (128-aligned segment starts)
    b_all = jnp.zeros((1, B_TOTAL), jnp.float32)
    b_all = b_all.at[0, B1_OFF:B1_OFF + W1_COLS].set(jnp.tile(b1, L1))
    b_all = b_all.at[0, B2_OFF:B2_OFF + W2_COLS].set(jnp.tile(b2, L2))
    b_all = b_all.at[0, B3_OFF:B3_OFF + W3_COLS].set(jnp.tile(b3, L3))
    b_all = b_all.at[0, BD_OFF:BD_OFF + HIDDEN].set(bd)
    b_all = b_all.at[0, BO_OFF:BO_OFF + ACTION_SIZE].set(bo)

    bf16 = jnp.bfloat16
    return (W1.astype(bf16), W2.astype(bf16), W3.astype(bf16),
            Wd.astype(bf16), Wo.astype(bf16), b_all)


# ----------------------------------------------------------------------------
# Forward wrapper: batch-gridded pallas_call.
# ----------------------------------------------------------------------------
@functools.partial(jax.jit, static_argnames=("block_b", "return_padded"))
def qnetwork_forward(state, prepped, block_b=1024, return_padded=False):
    """state: (B, 37) f32, prepped = prepare_params(params).

    Returns (B, action_size) f32 (module semantics). Consumers that want to
    avoid the extra post-call slice/cast can pass return_padded=True and use
    the first ACTION_SIZE lanes of the (Bp, 128) bf16 slab directly.
    """
    B = state.shape[0]
    bm = _choose_bm(B, block_b)
    Bp = _round_up(B, bm)
    # pad batch to a multiple of bm and lanes 37 -> 64 (zero rows in W1 match)
    x = jnp.pad(state, ((0, Bp - B), (0, K1_PAD - STATE_SIZE)))

    (W1, W2, W3, Wd, Wo, b_all) = prepped

    def pinned(arr):
        # whole weight resident in VMEM; same block every grid step -> no re-DMA
        return pl.BlockSpec(arr.shape, lambda i: (0, 0))

    out = pl.pallas_call(
        qnet_kernel,
        out_shape=jax.ShapeDtypeStruct((Bp, OUT_PAD), jnp.bfloat16),
        grid=(Bp // bm,),
        in_specs=[pl.BlockSpec((bm, K1_PAD), lambda i: (i, 0))]
                + [pinned(a) for a in (W1, W2, W3, Wd, Wo, b_all)],
        out_specs=pl.BlockSpec((bm, OUT_PAD), lambda i: (i, 0)),
        compiler_params=pltpu.CompilerParams(
            dimension_semantics=("parallel",)),
    )(x, W1, W2, W3, Wd, Wo, b_all)

    if return_padded:
        return out
    return out[:B, :ACTION_SIZE].astype(jnp.float32)


# ----------------------------------------------------------------------------
# Synthetic init + references.
# ----------------------------------------------------------------------------
def init_params(key):
    def unif(k, shape, fan_in):
        bound = 1.0 / jnp.sqrt(jnp.float32(fan_in))
        return jax.random.uniform(k, shape, jnp.float32, -bound, bound)

    ks = jax.random.split(key, 10)
    w1 = unif(ks[0], (32, 1, 7), 1 * 7)
    b1 = unif(ks[1], (32,), 1 * 7)
    w2 = unif(ks[2], (64, 32, 4), 32 * 4)
    b2 = unif(ks[3], (64,), 32 * 4)
    w3 = unif(ks[4], (64, 64, 3), 64 * 3)
    b3 = unif(ks[5], (64,), 64 * 3)
    wd = unif(ks[6], (HIDDEN, FLAT), FLAT)
    bd = unif(ks[7], (HIDDEN,), FLAT)
    wo = unif(ks[8], (ACTION_SIZE, HIDDEN), HIDDEN)
    bo = unif(ks[9], (ACTION_SIZE,), HIDDEN)
    return (w1, b1, w2, b2, w3, b3, wd, bd, wo, bo)


def reference_forward(state, params):
    """Full-precision mirror of the PyTorch forward."""
    (w1, b1, w2, b2, w3, b3, wd, bd, wo, bo) = params
    dn = ("NCH", "OIH", "NCH")
    x = state[:, None, :]                                    # (B, 1, 37)
    x = jax.nn.relu(lax.conv_general_dilated(x, w1, (2,), "VALID",
                                             dimension_numbers=dn)
                    + b1[None, :, None])
    x = jax.nn.relu(lax.conv_general_dilated(x, w2, (2,), "VALID",
                                             dimension_numbers=dn)
                    + b2[None, :, None])
    x = jax.nn.relu(lax.conv_general_dilated(x, w3, (1,), "VALID",
                                             dimension_numbers=dn)
                    + b3[None, :, None])
    flat = x.reshape(x.shape[0], -1)                          # (B, 320), c*5+l
    h = jax.nn.relu(flat @ wd.T + bd)
    return h @ wo.T + bo


def reference_forward_prepped(state, prepped):
    """Exact replica of the kernel math in plain JAX (tight-tolerance check)."""
    (W1, W2, W3, Wd, Wo, b_all) = prepped
    x = jnp.pad(state, ((0, 0), (0, K1_PAD - STATE_SIZE))).astype(jnp.bfloat16)
    a1 = jnp.maximum(jnp.dot(x, W1, preferred_element_type=jnp.float32)
                     + b_all[:, B1_OFF:B1_OFF + W1_COLS], 0.0).astype(jnp.bfloat16)
    a2 = jnp.maximum(jnp.dot(a1, W2, preferred_element_type=jnp.float32)
                     + b_all[:, B2_OFF:B2_OFF + W2_COLS], 0.0).astype(jnp.bfloat16)
    a3 = jnp.maximum(jnp.dot(a2, W3, preferred_element_type=jnp.float32)
                     + b_all[:, B3_OFF:B3_OFF + W3_COLS], 0.0).astype(jnp.bfloat16)
    h = jnp.maximum(jnp.dot(a3, Wd, preferred_element_type=jnp.float32)
                    + b_all[:, BD_OFF:BD_OFF + HIDDEN], 0.0).astype(jnp.bfloat16)
    o = (jnp.dot(h, Wo, preferred_element_type=jnp.float32)
         + b_all[:, BO_OFF:BO_OFF + OUT_PAD]).astype(jnp.bfloat16)
    return o[:, :ACTION_SIZE].astype(jnp.float32)


if __name__ == "__main__":
    key = jax.random.PRNGKey(0)
    k_param, k_state = jax.random.split(key)
    params = init_params(k_param)
    prepped = prepare_params(params)       # one-time weight re-layout (hoisted)

    # --- small batch (module spec shape) -------------------------------------
    B = 2
    state = jax.random.normal(k_state, (B, STATE_SIZE), jnp.float32)
    out = jax.block_until_ready(qnetwork_forward(state, prepped))
    ref = jax.block_until_ready(reference_forward(state, params))
    ref_exact = jax.block_until_ready(reference_forward_prepped(state, prepped))

    assert out.shape == (B, ACTION_SIZE)
    # bf16 matmul operands/output -> relaxed tolerance vs f32 reference
    assert jnp.allclose(out, ref, atol=5e-2, rtol=5e-2), (
        f"mismatch vs f32 ref: max abs err {jnp.max(jnp.abs(out - ref))}")
    # tight tolerance vs bf16-identical reference (catches layout bugs)
    assert jnp.allclose(out, ref_exact, atol=1e-2, rtol=1e-2), (
        f"mismatch vs bf16 ref: max abs err {jnp.max(jnp.abs(out - ref_exact))}")

    # --- larger batch: exercises >=2 grid steps + batch padding --------------
    B2 = 40
    state2 = jax.random.normal(jax.random.PRNGKey(1), (B2, STATE_SIZE), jnp.float32)
    out2 = jax.block_until_ready(qnetwork_forward(state2, prepped))
    ref2 = jax.block_until_ready(reference_forward(state2, params))
    assert out2.shape == (B2, ACTION_SIZE)
    assert jnp.allclose(out2, ref2, atol=5e-2, rtol=5e-2), (
        f"mismatch (B=40): max abs err {jnp.max(jnp.abs(out2 - ref2))}")

    print("KERNEL_OK")
</pallas_src>

<mosaic_0001>
module attributes {stable_mosaic.version = 11 : i64} {
  func.func @qnet_kernel(%arg0: i32, %arg1: memref<8x64xf32, #tpu.memory_space<vmem>>, %arg2: memref<64x512xbf16, #tpu.memory_space<vmem>>, %arg3: memref<512x448xbf16, #tpu.memory_space<vmem>>, %arg4: memref<448x320xbf16, #tpu.memory_space<vmem>>, %arg5: memref<320x512xbf16, #tpu.memory_space<vmem>>, %arg6: memref<512x128xbf16, #tpu.memory_space<vmem>>, %arg7: memref<1x2048xf32, #tpu.memory_space<vmem>>, %arg8: memref<8x128xbf16, #tpu.memory_space<vmem>>) attributes {dimension_semantics = [#tpu.dimension_semantics<parallel>], iteration_bounds = array<i64: 1>, scalar_prefetch = 0 : i64, scratch_operands = 0 : i64, tpu.core_type = #tpu.core_type<tc>, window_params = [{transform_indices = @transform_0, window_bounds = array<i64: 8, 64>}, {pipeline_mode = #tpu.pipeline_mode<synchronous>, transform_indices = @transform_1, window_bounds = array<i64: 64, 512>}, {pipeline_mode = #tpu.pipeline_mode<synchronous>, transform_indices = @transform_2, window_bounds = array<i64: 512, 448>}, {pipeline_mode = #tpu.pipeline_mode<synchronous>, transform_indices = @transform_3, window_bounds = array<i64: 448, 320>}, {pipeline_mode = #tpu.pipeline_mode<synchronous>, transform_indices = @transform_4, window_bounds = array<i64: 320, 512>}, {pipeline_mode = #tpu.pipeline_mode<synchronous>, transform_indices = @transform_5, window_bounds = array<i64: 512, 128>}, {pipeline_mode = #tpu.pipeline_mode<synchronous>, transform_indices = @transform_6, window_bounds = array<i64: 1, 2048>}, {transform_indices = @transform_7, window_bounds = array<i64: 8, 128>}]} {
    %c0 = arith.constant 0 : index
    %c0_0 = arith.constant 0 : index
    %0 = vector.load %arg1[%c0, %c0_0] : memref<8x64xf32, #tpu.memory_space<vmem>>, vector<8x64xf32>
    %1 = arith.truncf %0 : vector<8x64xf32> to vector<8x64xbf16>
    %c0_1 = arith.constant 0 : index
    %c0_2 = arith.constant 0 : index
    %2 = vector.load %arg2[%c0_1, %c0_2] : memref<64x512xbf16, #tpu.memory_space<vmem>>, vector<64x512xbf16>
    %cst = arith.constant dense<0.000000e+00> : vector<8x512xf32>
    %3 = tpu.matmul %1, %2, %cst {dimension_numbers = #tpu.dot_dimension_numbers<[1], [0], [0], [1], [0, 0, 1, 1], [], []>} : vector<8x64xbf16>, vector<64x512xbf16>, vector<8x512xf32> -> vector<8x512xf32>
    %c0_3 = arith.constant 0 : index
    %c0_4 = arith.constant 0 : index
    %4 = vector.load %arg7[%c0_3, %c0_4] : memref<1x2048xf32, #tpu.memory_space<vmem>>, vector<1x512xf32>
    %5 = vector.broadcast %4 : vector<1x512xf32> to vector<8x512xf32>
    %6 = arith.addf %3, %5 : vector<8x512xf32>
    %cst_5 = arith.constant 0.000000e+00 : f32
    %7 = vector.broadcast %cst_5 : f32 to vector<8x512xf32>
    %8 = arith.maximumf %6, %7 : vector<8x512xf32>
    %9 = arith.truncf %8 : vector<8x512xf32> to vector<8x512xbf16>
    %c0_6 = arith.constant 0 : index
    %c0_7 = arith.constant 0 : index
    %10 = vector.load %arg3[%c0_6, %c0_7] : memref<512x448xbf16, #tpu.memory_space<vmem>>, vector<512x448xbf16>
    %cst_8 = arith.constant dense<0.000000e+00> : vector<8x448xf32>
    %11 = tpu.matmul %9, %10, %cst_8 {dimension_numbers = #tpu.dot_dimension_numbers<[1], [0], [0], [1], [0, 0, 1, 1], [], []>} : vector<8x512xbf16>, vector<512x448xbf16>, vector<8x448xf32> -> vector<8x448xf32>
    %c0_9 = arith.constant 0 : index
    %c512 = arith.constant 512 : index
    %12 = vector.load %arg7[%c0_9, %c512] : memref<1x2048xf32, #tpu.memory_space<vmem>>, vector<1x448xf32>
    %13 = vector.broadcast %12 : vector<1x448xf32> to vector<8x448xf32>
    %14 = arith.addf %11, %13 : vector<8x448xf32>
    %cst_10 = arith.constant 0.000000e+00 : f32
    %15 = vector.broadcast %cst_10 : f32 to vector<8x448xf32>
    %16 = arith.maximumf %14, %15 : vector<8x448xf32>
    %17 = arith.truncf %16 : vector<8x448xf32> to vector<8x448xbf16>
    %c0_11 = arith.constant 0 : index
    %c0_12 = arith.constant 0 : index
    %18 = vector.load %arg4[%c0_11, %c0_12] : memref<448x320xbf16, #tpu.memory_space<vmem>>, vector<448x320xbf16>
    %cst_13 = arith.constant dense<0.000000e+00> : vector<8x320xf32>
    %19 = tpu.matmul %17, %18, %cst_13 {dimension_numbers = #tpu.dot_dimension_numbers<[1], [0], [0], [1], [0, 0, 1, 1], [], []>} : vector<8x448xbf16>, vector<448x320xbf16>, vector<8x320xf32> -> vector<8x320xf32>
    %c0_14 = arith.constant 0 : index
    %c1024 = arith.constant 1024 : index
    %20 = vector.load %arg7[%c0_14, %c1024] : memref<1x2048xf32, #tpu.memory_space<vmem>>, vector<1x320xf32>
    %21 = vector.broadcast %20 : vector<1x320xf32> to vector<8x320xf32>
    %22 = arith.addf %19, %21 : vector<8x320xf32>
    %cst_15 = arith.constant 0.000000e+00 : f32
    %23 = vector.broadcast %cst_15 : f32 to vector<8x320xf32>
    %24 = arith.maximumf %22, %23 : vector<8x320xf32>
    %25 = arith.truncf %24 : vector<8x320xf32> to vector<8x320xbf16>
    %c0_16 = arith.constant 0 : index
    %c0_17 = arith.constant 0 : index
    %26 = vector.load %arg5[%c0_16, %c0_17] : memref<320x512xbf16, #tpu.memory_space<vmem>>, vector<320x512xbf16>
    %cst_18 = arith.constant dense<0.000000e+00> : vector<8x512xf32>
    %27 = tpu.matmul %25, %26, %cst_18 {dimension_numbers = #tpu.dot_dimension_numbers<[1], [0], [0], [1], [0, 0, 1, 1], [], []>} : vector<8x320xbf16>, vector<320x512xbf16>, vector<8x512xf32> -> vector<8x512xf32>
    %c0_19 = arith.constant 0 : index
    %c1408 = arith.constant 1408 : index
    %28 = vector.load %arg7[%c0_19, %c1408] : memref<1x2048xf32, #tpu.memory_space<vmem>>, vector<1x512xf32>
    %29 = vector.broadcast %28 : vector<1x512xf32> to vector<8x512xf32>
    %30 = arith.addf %27, %29 : vector<8x512xf32>
    %cst_20 = arith.constant 0.000000e+00 : f32
    %31 = vector.broadcast %cst_20 : f32 to vector<8x512xf32>
    %32 = arith.maximumf %30, %31 : vector<8x512xf32>
    %33 = arith.truncf %32 : vector<8x512xf32> to vector<8x512xbf16>
    %c0_21 = arith.constant 0 : index
    %c0_22 = arith.constant 0 : index
    %34 = vector.load %arg6[%c0_21, %c0_22] : memref<512x128xbf16, #tpu.memory_space<vmem>>, vector<512x128xbf16>
    %cst_23 = arith.constant dense<0.000000e+00> : vector<8x128xf32>
    %35 = tpu.matmul %33, %34, %cst_23 {dimension_numbers = #tpu.dot_dimension_numbers<[1], [0], [0], [1], [0, 0, 1, 1], [], []>} : vector<8x512xbf16>, vector<512x128xbf16>, vector<8x128xf32> -> vector<8x128xf32>
    %c0_24 = arith.constant 0 : index
    %c1920 = arith.constant 1920 : index
    %36 = vector.load %arg7[%c0_24, %c1920] : memref<1x2048xf32, #tpu.memory_space<vmem>>, vector<1x128xf32>
    %37 = vector.broadcast %36 : vector<1x128xf32> to vector<8x128xf32>
    %38 = arith.addf %35, %37 : vector<8x128xf32>
    %39 = arith.truncf %38 : vector<8x128xf32> to vector<8x128xbf16>
    %c0_25 = arith.constant 0 : index
    %c0_26 = arith.constant 0 : index
    %40 = vector.load %arg8[%c0_25, %c0_26] : memref<8x128xbf16, #tpu.memory_space<vmem>>, vector<8x128xbf16>
    tpu.vector_store %arg8[%c0_25, %c0_26], %39 {strides = array<i32>} : memref<8x128xbf16, #tpu.memory_space<vmem>>, vector<8x128xbf16>,
    return
  }
  func.func @transform_0(%arg0: i32) -> (i32, i32) {
    %c0_i32 = arith.constant 0 : i32
    %c0_i32_0 = arith.constant 0 : i32
    return %arg0, %c0_i32 : i32, i32
  }
  func.func @transform_1(%arg0: i32) -> (i32, i32) {
    %c0_i32 = arith.constant 0 : i32
    %c0_i32_0 = arith.constant 0 : i32
    %c0_i32_1 = arith.constant 0 : i32
    return %c0_i32, %c0_i32_0 : i32, i32
  }
  func.func @transform_2(%arg0: i32) -> (i32, i32) {
    %c0_i32 = arith.constant 0 : i32
    %c0_i32_0 = arith.constant 0 : i32
    %c0_i32_1 = arith.constant 0 : i32
    return %c0_i32, %c0_i32_0 : i32, i32
  }
  func.func @transform_3(%arg0: i32) -> (i32, i32) {
    %c0_i32 = arith.constant 0 : i32
    %c0_i32_0 = arith.constant 0 : i32
    %c0_i32_1 = arith.constant 0 : i32
    return %c0_i32, %c0_i32_0 : i32, i32
  }
  func.func @transform_4(%arg0: i32) -> (i32, i32) {
    %c0_i32 = arith.constant 0 : i32
    %c0_i32_0 = arith.constant 0 : i32
    %c0_i32_1 = arith.constant 0 : i32
    return %c0_i32, %c0_i32_0 : i32, i32
  }
  func.func @transform_5(%arg0: i32) -> (i32, i32) {
    %c0_i32 = arith.constant 0 : i32
    %c0_i32_0 = arith.constant 0 : i32
    %c0_i32_1 = arith.constant 0 : i32
    return %c0_i32, %c0_i32_0 : i32, i32
  }
  func.func @transform_6(%arg0: i32) -> (i32, i32) {
    %c0_i32 = arith.constant 0 : i32
    %c0_i32_0 = arith.constant 0 : i32
    %c0_i32_1 = arith.constant 0 : i32
    return %c0_i32, %c0_i32_0 : i32, i32
  }
  func.func @transform_7(%arg0: i32) -> (i32, i32) {
    %c0_i32 = arith.constant 0 : i32
    %c0_i32_0 = arith.constant 0 : i32
    return %arg0, %c0_i32 : i32, i32
  }
}

</mosaic_0001>

<llo_original>
// kernel: qnetwork_forward.1
$region0: #{qnetwork_forward.1}
  #allocation0 [shape = 'u32[]', space=smem, size = 0x4, offset = 0x4, fixed_abs, tag = 'smem constant byte address 0x4 - core index']
  #allocation1 [shape = 'u32[72,128]{1,0:T(1,128)}', space=vmem, size = 0x9000, scoped, tag = 'internal scratch']
  %s0 = inlined_call_operand.vmem [shape: f32[8,64], index: 0, kind: input, shape index: {}]
  %s1 = inlined_call_operand.vmem [shape: bf16[64,512], index: 1, kind: input, shape index: {}]
  %s2 = inlined_call_operand.vmem [shape: bf16[512,448], index: 2, kind: input, shape index: {}]
  %s3 = inlined_call_operand.vmem [shape: bf16[448,320], index: 3, kind: input, shape index: {}]
  %s4 = inlined_call_operand.vmem [shape: bf16[320,512], index: 4, kind: input, shape index: {}]
  %s5 = inlined_call_operand.vmem [shape: bf16[512,128], index: 5, kind: input, shape index: {}]
  %s6 = inlined_call_operand.vmem [shape: f32[1,2048], index: 6, kind: input, shape index: {}]
  %s7 = inlined_call_operand.vmem [shape: bf16[8,128], index: 7, kind: output, shape index: {}]
  %s8 = sld [smem:[#allocation0]]
  $region38: #{qnetwork_forward.1} parent=0
    _
  %s10 = ssub.s32 1, %s8
  %s11 = scalar_select 0, %s10, %s8
  // Predicated region
  $region2: #{qnetwork_forward.1} parent=0 // pred_check
    _
  $region3: #{qnetwork_forward.1} parent=0 // pred_check_branch
    %13 = sbr.rel (0) target = $region5
  $region4: #{qnetwork_forward.1} parent=0 // pred_region
    _
  $region5: #{qnetwork_forward.1} parent=0 // pred_fallthru
    _
  // Predicated region
  $region6: #{qnetwork_forward.1} parent=0 // pred_check
    _
  $region7: #{qnetwork_forward.1} parent=0 // pred_check_branch
    %15 = sbr.rel (0) target = $region9
  $region8: #{qnetwork_forward.1} parent=0 // pred_region
    _
  $region9: #{qnetwork_forward.1} parent=0 // pred_fallthru
    _
  // Predicated region
  $region10: #{qnetwork_forward.1} parent=0 // pred_check
    _
  $region11: #{qnetwork_forward.1} parent=0 // pred_check_branch
    %17 = sbr.rel (0) target = $region13
  $region12: #{qnetwork_forward.1} parent=0 // pred_region
    _
  $region13: #{qnetwork_forward.1} parent=0 // pred_fallthru
    _
  // Predicated region
  $region14: #{qnetwork_forward.1} parent=0 // pred_check
    _
  $region15: #{qnetwork_forward.1} parent=0 // pred_check_branch
    %19 = sbr.rel (0) target = $region17
  $region16: #{qnetwork_forward.1} parent=0 // pred_region
    _
  $region17: #{qnetwork_forward.1} parent=0 // pred_fallthru
    _
  // Predicated region
  $region18: #{qnetwork_forward.1} parent=0 // pred_check
    _
  $region19: #{qnetwork_forward.1} parent=0 // pred_check_branch
    %21 = sbr.rel (0) target = $region21
  $region20: #{qnetwork_forward.1} parent=0 // pred_region
    _
  $region21: #{qnetwork_forward.1} parent=0 // pred_fallthru
    _
  // Predicated region
  $region22: #{qnetwork_forward.1} parent=0 // pred_check
    _
  $region23: #{qnetwork_forward.1} parent=0 // pred_check_branch
    %23 = sbr.rel (0) target = $region25
  $region24: #{qnetwork_forward.1} parent=0 // pred_region
    _
  $region25: #{qnetwork_forward.1} parent=0 // pred_fallthru
    _
  // Predicated region
  $region26: #{qnetwork_forward.1} parent=0 // pred_check
    _
  $region27: #{qnetwork_forward.1} parent=0 // pred_check_branch
    %25 = sbr.rel (0) target = $region29
  $region28: #{qnetwork_forward.1} parent=0 // pred_region
    _
  $region29: #{qnetwork_forward.1} parent=0 // pred_fallthru
    _
  %v27 = vld [vmem:[%s0] sm:$0xff]
  %v28 = vpack.c.bf16 %v27, %v27
  %v29 = vld [vmem:[%s1] sm:$0xff]
  %v30 = vld [vmem:[%s1 + $0x8] sm:$0xff]
  %v31 = vld [vmem:[%s1 + $0x10] sm:$0xff]
  %v32 = vld [vmem:[%s1 + $0x18] sm:$0xff]
  %v33 = vld [vmem:[%s1 + $0x20] sm:$0xff]
  %v34 = vld [vmem:[%s1 + $0x28] sm:$0xff]
  %v35 = vld [vmem:[%s1 + $0x30] sm:$0xff]
  %v36 = vld [vmem:[%s1 + $0x38] sm:$0xff]
  %v37 = vld [vmem:[%s1 + $0x40] sm:$0xff]
  %v38 = vld [vmem:[%s1 + $0x48] sm:$0xff]
  %v39 = vld [vmem:[%s1 + $0x50] sm:$0xff]
  %v40 = vld [vmem:[%s1 + $0x58] sm:$0xff]
  %v41 = vld [vmem:[%s1 + $0x60] sm:$0xff]
  %v42 = vld [vmem:[%s1 + $0x68] sm:$0xff]
  %v43 = vld [vmem:[%s1 + $0x70] sm:$0xff]
  %v44 = vld [vmem:[%s1 + $0x78] sm:$0xff]
  %v45 = vld [vmem:[%s6] sm:$0xf]
  %v47 = vperm.slane %v45, 0
  %v48 = vperm.slane %v45, 1
  %v49 = vperm.slane %v45, 2
  %v50 = vperm.slane %v45, 3
  %v71 = vunpack.c.l.b16 %v29
  %v72 = vunpack.c.h.b16 %v29
  %v73 = vunpack.c.l.b16 %v30
  %v74 = vunpack.c.h.b16 %v30
  %v75 = vunpack.c.l.b16 %v31
  %v76 = vunpack.c.h.b16 %v31
  %v77 = vunpack.c.l.b16 %v32
  %v78 = vunpack.c.h.b16 %v32
  %v79 = vunpack.c.l.b16 %v33
  %v80 = vunpack.c.h.b16 %v33
  %v81 = vunpack.c.l.b16 %v34
  %v82 = vunpack.c.h.b16 %v34
  %v83 = vunpack.c.l.b16 %v35
  %v84 = vunpack.c.h.b16 %v35
  %v85 = vunpack.c.l.b16 %v36
  %v86 = vunpack.c.h.b16 %v36
  %v87 = vunpack.c.l.b16 %v37
  %v88 = vunpack.c.h.b16 %v37
  %v89 = vunpack.c.l.b16 %v38
  %v90 = vunpack.c.h.b16 %v38
  %v91 = vunpack.c.l.b16 %v39
  %v92 = vunpack.c.h.b16 %v39
  %v93 = vunpack.c.l.b16 %v40
  %v94 = vunpack.c.h.b16 %v40
  %v95 = vunpack.c.l.b16 %v41
  %v96 = vunpack.c.h.b16 %v41
  %v97 = vunpack.c.l.b16 %v42
  %v98 = vunpack.c.h.b16 %v42
  %v99 = vunpack.c.l.b16 %v43
  %v100 = vunpack.c.h.b16 %v43
  %v101 = vunpack.c.l.b16 %v44
  %v102 = vunpack.c.h.b16 %v44
  %v103 = vpack.c.b16 %v75, %v71
  %v104 = vpack.c.b16 %v76, %v72
  %v105 = vpack.c.b16 %v77, %v73
  %v106 = vpack.c.b16 %v78, %v74
  %v107 = vpack.c.b16 %v83, %v79
  %v108 = vpack.c.b16 %v84, %v80
  %v109 = vpack.c.b16 %v85, %v81
  %v110 = vpack.c.b16 %v86, %v82
  %v111 = vpack.c.b16 %v91, %v87
  %v112 = vpack.c.b16 %v92, %v88
  %v113 = vpack.c.b16 %v93, %v89
  %v114 = vpack.c.b16 %v94, %v90
  %v115 = vpack.c.b16 %v99, %v95
  %v116 = vpack.c.b16 %v100, %v96
  %v117 = vpack.c.b16 %v101, %v97
  %v118 = vpack.c.b16 %v102, %v98
  %vm135 = vcmask 523264
  %v137 = vsel %vm135, %v28, 0
  %139 = vmatpush.bf16.msra.mxu0 0
  %140 = vmatpush.bf16.msra.mxu0 0
  %141 = vmatpush.bf16.msra.mxu0 0
  %142 = vmatpush.bf16.msra.mxu0 0
  %143 = vmatpush.bf16.msra.mxu0 %v115
  %144 = vmatpush.bf16.msra.mxu0 %v111
  %145 = vmatpush.bf16.msra.mxu0 %v107
  %146 = vmatpush.bf16.msra.mxu0 %v103
  %147 = vmatmul.bf16.gmra.mxu0 %v137
  %v148 = vpop.f32.mrf.mxu0
  %v149 = vadd.f32 %v47, %v148
  %v150 = vpop.f32.mrf.mxu0
  %151 = vdwg.mxu0
  %152 = vmatpush.bf16.msra.mxu0 0
  %153 = vmatpush.bf16.msra.mxu0 0
  %154 = vmatpush.bf16.msra.mxu0 0
  %155 = vmatpush.bf16.msra.mxu0 0
  %156 = vmatpush.bf16.msra.mxu0 %v116
  %157 = vmatpush.bf16.msra.mxu0 %v112
  %158 = vmatpush.bf16.msra.mxu0 %v108
  %159 = vmatpush.bf16.msra.mxu0 %v104
  %160 = vmatmul.bf16.gmra.mxu0 %v137
  %v161 = vpop.f32.mrf.mxu0
  %v162 = vadd.f32 %v48, %v161
  %v163 = vpop.f32.mrf.mxu0
  %164 = vdwg.mxu0
  %165 = vmatpush.bf16.msra.mxu0 0
  %166 = vmatpush.bf16.msra.mxu0 0
  %167 = vmatpush.bf16.msra.mxu0 0
  %168 = vmatpush.bf16.msra.mxu0 0
  %169 = vmatpush.bf16.msra.mxu0 %v117
  %170 = vmatpush.bf16.msra.mxu0 %v113
  %171 = vmatpush.bf16.msra.mxu0 %v109
  %172 = vmatpush.bf16.msra.mxu0 %v105
  %173 = vmatmul.bf16.gmra.mxu0 %v137
  %v174 = vpop.f32.mrf.mxu0
  %v175 = vadd.f32 %v49, %v174
  %v176 = vpop.f32.mrf.mxu0
  %177 = vdwg.mxu0
  %178 = vmatpush.bf16.msra.mxu0 0
  %179 = vmatpush.bf16.msra.mxu0 0
  %180 = vmatpush.bf16.msra.mxu0 0
  %181 = vmatpush.bf16.msra.mxu0 0
  %182 = vmatpush.bf16.msra.mxu0 %v118
  %183 = vmatpush.bf16.msra.mxu0 %v114
  %184 = vmatpush.bf16.msra.mxu0 %v110
  %185 = vmatpush.bf16.msra.mxu0 %v106
  %186 = vmatmul.bf16.gmra.mxu0 %v137
  %v187 = vpop.f32.mrf.mxu0
  %v188 = vadd.f32 %v50, %v187
  %v189 = vpop.f32.mrf.mxu0
  %190 = vdwg.mxu0
  %v191 = vmax.f32 %v149, 0.0
  %v192 = vmax.f32 %v162, 0.0
  %v193 = vmax.f32 %v175, 0.0
  %v194 = vmax.f32 %v188, 0.0
  %v195 = vpack.c.bf16 %v191, %v191
  %v196 = vpack.c.bf16 %v192, %v192
  %v197 = vpack.c.bf16 %v193, %v193
  %v198 = vpack.c.bf16 %v194, %v194
  %v199 = vld [vmem:[%s2] sm:$0xff]
  %v200 = vld [vmem:[%s2 + $0x8] sm:$0xff]
  %v201 = vld [vmem:[%s2 + $0x10] sm:$0xff]
  %v202 = vld [vmem:[%s2 + $0x18] sm:$0xff]
  %v203 = vld [vmem:[%s2 + $0x20] sm:$0xff]
  %v204 = vld [vmem:[%s2 + $0x28] sm:$0xff]
  %v205 = vld [vmem:[%s2 + $0x30] sm:$0xff]
  %v206 = vld [vmem:[%s2 + $0x38] sm:$0xff]
  %v207 = vld [vmem:[%s2 + $0x40] sm:$0xff]
  %v208 = vld [vmem:[%s2 + $0x48] sm:$0xff]
  %v209 = vld [vmem:[%s2 + $0x50] sm:$0xff]
  %v210 = vld [vmem:[%s2 + $0x58] sm:$0xff]
  %v211 = vld [vmem:[%s2 + $0x60] sm:$0xff]
  %v212 = vld [vmem:[%s2 + $0x68] sm:$0xff]
  %v213 = vld [vmem:[%s2 + $0x70] sm:$0xff]
  %v214 = vld [vmem:[%s2 + $0x78] sm:$0xff]
  %v215 = vld [vmem:[%s2 + $0x80] sm:$0xff]
  %v216 = vld [vmem:[%s2 + $0x88] sm:$0xff]
  %v217 = vld [vmem:[%s2 + $0x90] sm:$0xff]
  %v218 = vld [vmem:[%s2 + $0x98] sm:$0xff]
  %v219 = vld [vmem:[%s2 + $0xa0] sm:$0xff]
  %v220 = vld [vmem:[%s2 + $0xa8] sm:$0xff]
  %v221 = vld [vmem:[%s2 + $0xb0] sm:$0xff]
  %v222 = vld [vmem:[%s2 + $0xb8] sm:$0xff]
  %v223 = vld [vmem:[%s2 + $0xc0] sm:$0xff]
  %v224 = vld [vmem:[%s2 + $0xc8] sm:$0xff]
  %v225 = vld [vmem:[%s2 + $0xd0] sm:$0xff]
  %v226 = vld [vmem:[%s2 + $0xd8] sm:$0xff]
  %v227 = vld [vmem:[%s2 + $0xe0] sm:$0xff]
  %v228 = vld [vmem:[%s2 + $0xe8] sm:$0xff]
  %v229 = vld [vmem:[%s2 + $0xf0] sm:$0xff]
  %v230 = vld [vmem:[%s2 + $0xf8] sm:$0xff]
  %v231 = vld [vmem:[%s2 + $0x100] sm:$0xff]
  %v232 = vld [vmem:[%s2 + $0x108] sm:$0xff]
  %v233 = vld [vmem:[%s2 + $0x110] sm:$0xff]
  %v234 = vld [vmem:[%s2 + $0x118] sm:$0xff]
  %v235 = vld [vmem:[%s2 + $0x120] sm:$0xff]
  %v236 = vld [vmem:[%s2 + $0x128] sm:$0xff]
  %v237 = vld [vmem:[%s2 + $0x130] sm:$0xff]
  %v238 = vld [vmem:[%s2 + $0x138] sm:$0xff]
  %v239 = vld [vmem:[%s2 + $0x140] sm:$0xff]
  %v240 = vld [vmem:[%s2 + $0x148] sm:$0xff]
  %v241 = vld [vmem:[%s2 + $0x150] sm:$0xff]
  %v242 = vld [vmem:[%s2 + $0x158] sm:$0xff]
  %v243 = vld [vmem:[%s2 + $0x160] sm:$0xff]
  %v244 = vld [vmem:[%s2 + $0x168] sm:$0xff]
  %v245 = vld [vmem:[%s2 + $0x170] sm:$0xff]
  %v246 = vld [vmem:[%s2 + $0x178] sm:$0xff]
  %v247 = vld [vmem:[%s2 + $0x180] sm:$0xff]
  %v248 = vld [vmem:[%s2 + $0x188] sm:$0xff]
  %v249 = vld [vmem:[%s2 + $0x190] sm:$0xff]
  %v250 = vld [vmem:[%s2 + $0x198] sm:$0xff]
  %v251 = vld [vmem:[%s2 + $0x1a0] sm:$0xff]
  %v252 = vld [vmem:[%s2 + $0x1a8] sm:$0xff]
  %v253 = vld [vmem:[%s2 + $0x1b0] sm:$0xff]
  %v254 = vld [vmem:[%s2 + $0x1b8] sm:$0xff]
  %v255 = vld [vmem:[%s2 + $0x1c0] sm:$0xff]
  %v256 = vld [vmem:[%s2 + $0x1c8] sm:$0xff]
  %v257 = vld [vmem:[%s2 + $0x1d0] sm:$0xff]
  %v258 = vld [vmem:[%s2 + $0x1d8] sm:$0xff]
  %v259 = vld [vmem:[%s2 + $0x1e0] sm:$0xff]
  %v260 = vld [vmem:[%s2 + $0x1e8] sm:$0xff]
  %v261 = vld [vmem:[%s2 + $0x1f0] sm:$0xff]
  %v262 = vld [vmem:[%s2 + $0x1f8] sm:$0xff]
  %v263 = vld [vmem:[%s2 + $0x200] sm:$0xff]
  %v264 = vld [vmem:[%s2 + $0x208] sm:$0xff]
  %v265 = vld [vmem:[%s2 + $0x210] sm:$0xff]
  %v266 = vld [vmem:[%s2 + $0x218] sm:$0xff]
  %v267 = vld [vmem:[%s2 + $0x220] sm:$0xff]
  %v268 = vld [vmem:[%s2 + $0x228] sm:$0xff]
  %v269 = vld [vmem:[%s2 + $0x230] sm:$0xff]
  %v270 = vld [vmem:[%s2 + $0x238] sm:$0xff]
  %v271 = vld [vmem:[%s2 + $0x240] sm:$0xff]
  %v272 = vld [vmem:[%s2 + $0x248] sm:$0xff]
  %v273 = vld [vmem:[%s2 + $0x250] sm:$0xff]
  %v274 = vld [vmem:[%s2 + $0x258] sm:$0xff]
  %v275 = vld [vmem:[%s2 + $0x260] sm:$0xff]
  %v276 = vld [vmem:[%s2 + $0x268] sm:$0xff]
  %v277 = vld [vmem:[%s2 + $0x270] sm:$0xff]
  %v278 = vld [vmem:[%s2 + $0x278] sm:$0xff]
  %v279 = vld [vmem:[%s2 + $0x280] sm:$0xff]
  %v280 = vld [vmem:[%s2 + $0x288] sm:$0xff]
  %v281 = vld [vmem:[%s2 + $0x290] sm:$0xff]
  %v282 = vld [vmem:[%s2 + $0x298] sm:$0xff]
  %v283 = vld [vmem:[%s2 + $0x2a0] sm:$0xff]
  %v284 = vld [vmem:[%s2 + $0x2a8] sm:$0xff]
  %v285 = vld [vmem:[%s2 + $0x2b0] sm:$0xff]
  %v286 = vld [vmem:[%s2 + $0x2b8] sm:$0xff]
  %v287 = vld [vmem:[%s2 + $0x2c0] sm:$0xff]
  %v288 = vld [vmem:[%s2 + $0x2c8] sm:$0xff]
  %v289 = vld [vmem:[%s2 + $0x2d0] sm:$0xff]
  %v290 = vld [vmem:[%s2 + $0x2d8] sm:$0xff]
  %v291 = vld [vmem:[%s2 + $0x2e0] sm:$0xff]
  %v292 = vld [vmem:[%s2 + $0x2e8] sm:$0xff]
  %v293 = vld [vmem:[%s2 + $0x2f0] sm:$0xff]
  %v294 = vld [vmem:[%s2 + $0x2f8] sm:$0xff]
  %v295 = vld [vmem:[%s2 + $0x300] sm:$0xff]
  %v296 = vld [vmem:[%s2 + $0x308] sm:$0xff]
  %v297 = vld [vmem:[%s2 + $0x310] sm:$0xff]
  %v298 = vld [vmem:[%s2 + $0x318] sm:$0xff]
  %v299 = vld [vmem:[%s2 + $0x320] sm:$0xff]
  %v300 = vld [vmem:[%s2 + $0x328] sm:$0xff]
  %v301 = vld [vmem:[%s2 + $0x330] sm:$0xff]
  %v302 = vld [vmem:[%s2 + $0x338] sm:$0xff]
  %v303 = vld [vmem:[%s2 + $0x340] sm:$0xff]
  %v304 = vld [vmem:[%s2 + $0x348] sm:$0xff]
  %v305 = vld [vmem:[%s2 + $0x350] sm:$0xff]
  %v306 = vld [vmem:[%s2 + $0x358] sm:$0xff]
  %v307 = vld [vmem:[%s2 + $0x360] sm:$0xff]
  %v308 = vld [vmem:[%s2 + $0x368] sm:$0xff]
  %v309 = vld [vmem:[%s2 + $0x370] sm:$0xff]
  %v310 = vld [vmem:[%s2 + $0x378] sm:$0xff]
  %v311 = vld [vmem:[%s2 + $0x380] sm:$0xff]
  %v312 = vld [vmem:[%s2 + $0x388] sm:$0xff]
  %v313 = vld [vmem:[%s2 + $0x390] sm:$0xff]
  %v314 = vld [vmem:[%s2 + $0x398] sm:$0xff]
  %v315 = vld [vmem:[%s2 + $0x3a0] sm:$0xff]
  %v316 = vld [vmem:[%s2 + $0x3a8] sm:$0xff]
  %v317 = vld [vmem:[%s2 + $0x3b0] sm:$0xff]
  %v318 = vld [vmem:[%s2 + $0x3b8] sm:$0xff]
  %v319 = vld [vmem:[%s2 + $0x3c0] sm:$0xff]
  %v320 = vld [vmem:[%s2 + $0x3c8] sm:$0xff]
  %v321 = vld [vmem:[%s2 + $0x3d0] sm:$0xff]
  %v322 = vld [vmem:[%s2 + $0x3d8] sm:$0xff]
  %v323 = vld [vmem:[%s2 + $0x3e0] sm:$0xff]
  %v324 = vld [vmem:[%s2 + $0x3e8] sm:$0xff]
  %v325 = vld [vmem:[%s2 + $0x3f0] sm:$0xff]
  %v326 = vld [vmem:[%s2 + $0x3f8] sm:$0xff]
  %v327 = vld [vmem:[%s6 + $0x4] sm:$0xf]
  %v329 = vperm.slane %v327, 0
  %v330 = vperm.slane %v327, 1
  %v331 = vperm.slane %v327, 2
  %v332 = vperm.slane %v327, 3
  %v465 = vunpack.c.l.b16 %v199
  %v466 = vunpack.c.h.b16 %v199
  %v467 = vunpack.c.l.b16 %v200
  %v468 = vunpack.c.h.b16 %v200
  %v469 = vunpack.c.l.b16 %v201
  %v470 = vunpack.c.h.b16 %v201
  %v471 = vunpack.c.l.b16 %v202
  %v472 = vunpack.c.h.b16 %v202
  %v473 = vunpack.c.l.b16 %v203
  %v474 = vunpack.c.h.b16 %v203
  %v475 = vunpack.c.l.b16 %v204
  %v476 = vunpack.c.h.b16 %v204
  %v477 = vunpack.c.l.b16 %v205
  %v478 = vunpack.c.h.b16 %v205
  %v479 = vunpack.c.l.b16 %v206
  %v480 = vunpack.c.h.b16 %v206
  %v481 = vunpack.c.l.b16 %v207
  %v482 = vunpack.c.h.b16 %v207
  %v483 = vunpack.c.l.b16 %v208
  %v484 = vunpack.c.h.b16 %v208
  %v485 = vunpack.c.l.b16 %v209
  %v486 = vunpack.c.h.b16 %v209
  %v487 = vunpack.c.l.b16 %v210
  %v488 = vunpack.c.h.b16 %v210
  %v489 = vunpack.c.l.b16 %v211
  %v490 = vunpack.c.h.b16 %v211
  %v491 = vunpack.c.l.b16 %v212
  %v492 = vunpack.c.h.b16 %v212
  %v493 = vunpack.c.l.b16 %v213
  %v494 = vunpack.c.h.b16 %v213
  %v495 = vunpack.c.l.b16 %v214
  %v496 = vunpack.c.h.b16 %v214
  %v497 = vunpack.c.l.b16 %v215
  %v498 = vunpack.c.h.b16 %v215
  %v499 = vunpack.c.l.b16 %v216
  %v500 = vunpack.c.h.b16 %v216
  %v501 = vunpack.c.l.b16 %v217
  %v502 = vunpack.c.h.b16 %v217
  %v503 = vunpack.c.l.b16 %v218
  %v504 = vunpack.c.h.b16 %v218
  %v505 = vunpack.c.l.b16 %v219
  %v506 = vunpack.c.h.b16 %v219
  %v507 = vunpack.c.l.b16 %v220
  %v508 = vunpack.c.h.b16 %v220
  %v509 = vunpack.c.l.b16 %v221
  %v510 = vunpack.c.h.b16 %v221
  %v511 = vunpack.c.l.b16 %v222
  %v512 = vunpack.c.h.b16 %v222
  %v513 = vunpack.c.l.b16 %v223
  %v514 = vunpack.c.h.b16 %v223
  %v515 = vunpack.c.l.b16 %v224
  %v516 = vunpack.c.h.b16 %v224
  %v517 = vunpack.c.l.b16 %v225
  %v518 = vunpack.c.h.b16 %v225
  %v519 = vunpack.c.l.b16 %v226
  %v520 = vunpack.c.h.b16 %v226
  %v521 = vunpack.c.l.b16 %v227
  %v522 = vunpack.c.h.b16 %v227
  %v523 = vunpack.c.l.b16 %v228
  %v524 = vunpack.c.h.b16 %v228
  %v525 = vunpack.c.l.b16 %v229
  %v526 = vunpack.c.h.b16 %v229
  %v527 = vunpack.c.l.b16 %v230
  %v528 = vunpack.c.h.b16 %v230
  %v529 = vunpack.c.l.b16 %v231
  %v530 = vunpack.c.h.b16 %v231
  %v531 = vunpack.c.l.b16 %v232
  %v532 = vunpack.c.h.b16 %v232
  %v533 = vunpack.c.l.b16 %v233
  %v534 = vunpack.c.h.b16 %v233
  %v535 = vunpack.c.l.b16 %v234
  %v536 = vunpack.c.h.b16 %v234
  %v537 = vunpack.c.l.b16 %v235
  %v538 = vunpack.c.h.b16 %v235
  %v539 = vunpack.c.l.b16 %v236
  %v540 = vunpack.c.h.b16 %v236
  %v541 = vunpack.c.l.b16 %v237
  %v542 = vunpack.c.h.b16 %v237
  %v543 = vunpack.c.l.b16 %v238
  %v544 = vunpack.c.h.b16 %v238
  %v545 = vunpack.c.l.b16 %v239
  %v546 = vunpack.c.h.b16 %v239
  %v547 = vunpack.c.l.b16 %v240
  %v548 = vunpack.c.h.b16 %v240
  %v549 = vunpack.c.l.b16 %v241
  %v550 = vunpack.c.h.b16 %v241
  %v551 = vunpack.c.l.b16 %v242
  %v552 = vunpack.c.h.b16 %v242
  %v553 = vunpack.c.l.b16 %v243
  %v554 = vunpack.c.h.b16 %v243
  %v555 = vunpack.c.l.b16 %v244
  %v556 = vunpack.c.h.b16 %v244
  %v557 = vunpack.c.l.b16 %v245
  %v558 = vunpack.c.h.b16 %v245
  %v559 = vunpack.c.l.b16 %v246
  %v560 = vunpack.c.h.b16 %v246
  %v561 = vunpack.c.l.b16 %v247
  %v562 = vunpack.c.h.b16 %v247
  %v563 = vunpack.c.l.b16 %v248
  %v564 = vunpack.c.h.b16 %v248
  %v565 = vunpack.c.l.b16 %v249
  %v566 = vunpack.c.h.b16 %v249
  %v567 = vunpack.c.l.b16 %v250
  %v568 = vunpack.c.h.b16 %v250
  %v569 = vunpack.c.l.b16 %v251
  %v570 = vunpack.c.h.b16 %v251
  %v571 = vunpack.c.l.b16 %v252
  %v572 = vunpack.c.h.b16 %v252
  %v573 = vunpack.c.l.b16 %v253
  %v574 = vunpack.c.h.b16 %v253
  %v575 = vunpack.c.l.b16 %v254
  %v576 = vunpack.c.h.b16 %v254
  %v577 = vunpack.c.l.b16 %v255
  %v578 = vunpack.c.h.b16 %v255
  %v579 = vunpack.c.l.b16 %v256
  %v580 = vunpack.c.h.b16 %v256
  %v581 = vunpack.c.l.b16 %v257
  %v582 = vunpack.c.h.b16 %v257
  %v583 = vunpack.c.l.b16 %v258
  %v584 = vunpack.c.h.b16 %v258
  %v585 = vunpack.c.l.b16 %v259
  %v586 = vunpack.c.h.b16 %v259
  %v587 = vunpack.c.l.b16 %v260
  %v588 = vunpack.c.h.b16 %v260
  %v589 = vunpack.c.l.b16 %v261
  %v590 = vunpack.c.h.b16 %v261
  %v591 = vunpack.c.l.b16 %v262
  %v592 = vunpack.c.h.b16 %v262
  %v593 = vunpack.c.l.b16 %v263
  %v594 = vunpack.c.h.b16 %v263
  %v595 = vunpack.c.l.b16 %v264
  %v596 = vunpack.c.h.b16 %v264
  %v597 = vunpack.c.l.b16 %v265
  %v598 = vunpack.c.h.b16 %v265
  %v599 = vunpack.c.l.b16 %v266
  %v600 = vunpack.c.h.b16 %v266
  %v601 = vunpack.c.l.b16 %v267
  %v602 = vunpack.c.h.b16 %v267
  %v603 = vunpack.c.l.b16 %v268
  %v604 = vunpack.c.h.b16 %v268
  %v605 = vunpack.c.l.b16 %v269
  %v606 = vunpack.c.h.b16 %v269
  %v607 = vunpack.c.l.b16 %v270
  %v608 = vunpack.c.h.b16 %v270
  %v609 = vunpack.c.l.b16 %v271
  %v610 = vunpack.c.h.b16 %v271
  %v611 = vunpack.c.l.b16 %v272
  %v612 = vunpack.c.h.b16 %v272
  %v613 = vunpack.c.l.b16 %v273
  %v614 = vunpack.c.h.b16 %v273
  %v615 = vunpack.c.l.b16 %v274
  %v616 = vunpack.c.h.b16 %v274
  %v617 = vunpack.c.l.b16 %v275
  %v618 = vunpack.c.h.b16 %v275
  %v619 = vunpack.c.l.b16 %v276
  %v620 = vunpack.c.h.b16 %v276
  %v621 = vunpack.c.l.b16 %v277
  %v622 = vunpack.c.h.b16 %v277
  %v623 = vunpack.c.l.b16 %v278
  %v624 = vunpack.c.h.b16 %v278
  %v625 = vunpack.c.l.b16 %v279
  %v626 = vunpack.c.h.b16 %v279
  %v627 = vunpack.c.l.b16 %v280
  %v628 = vunpack.c.h.b16 %v280
  %v629 = vunpack.c.l.b16 %v281
  %v630 = vunpack.c.h.b16 %v281
  %v631 = vunpack.c.l.b16 %v282
  %v632 = vunpack.c.h.b16 %v282
  %v633 = vunpack.c.l.b16 %v283
  %v634 = vunpack.c.h.b16 %v283
  %v635 = vunpack.c.l.b16 %v284
  %v636 = vunpack.c.h.b16 %v284
  %v637 = vunpack.c.l.b16 %v285
  %v638 = vunpack.c.h.b16 %v285
  %v639 = vunpack.c.l.b16 %v286
  %v640 = vunpack.c.h.b16 %v286
  %v641 = vunpack.c.l.b16 %v287
  %v642 = vunpack.c.h.b16 %v287
  %v643 = vunpack.c.l.b16 %v288
  %v644 = vunpack.c.h.b16 %v288
  %v645 = vunpack.c.l.b16 %v289
  %v646 = vunpack.c.h.b16 %v289
  %v647 = vunpack.c.l.b16 %v290
  %v648 = vunpack.c.h.b16 %v290
  %v649 = vunpack.c.l.b16 %v291
  %v650 = vunpack.c.h.b16 %v291
  %v651 = vunpack.c.l.b16 %v292
  %v652 = vunpack.c.h.b16 %v292
  %v653 = vunpack.c.l.b16 %v293
  %v654 = vunpack.c.h.b16 %v293
  %v655 = vunpack.c.l.b16 %v294
  %v656 = vunpack.c.h.b16 %v294
  %v657 = vunpack.c.l.b16 %v295
  %v658 = vunpack.c.h.b16 %v295
  %v659 = vunpack.c.l.b16 %v296
  %v660 = vunpack.c.h.b16 %v296
  %v661 = vunpack.c.l.b16 %v297
  %v662 = vunpack.c.h.b16 %v297
  %v663 = vunpack.c.l.b16 %v298
  %v664 = vunpack.c.h.b16 %v298
  %v665 = vunpack.c.l.b16 %v299
  %v666 = vunpack.c.h.b16 %v299
  %v667 = vunpack.c.l.b16 %v300
  %v668 = vunpack.c.h.b16 %v300
  %v669 = vunpack.c.l.b16 %v301
  %v670 = vunpack.c.h.b16 %v301
  %v671 = vunpack.c.l.b16 %v302
  %v672 = vunpack.c.h.b16 %v302
  %v673 = vunpack.c.l.b16 %v303
  %v674 = vunpack.c.h.b16 %v303
  %v675 = vunpack.c.l.b16 %v304
  %v676 = vunpack.c.h.b16 %v304
  %v677 = vunpack.c.l.b16 %v305
  %v678 = vunpack.c.h.b16 %v305
  %v679 = vunpack.c.l.b16 %v306
  %v680 = vunpack.c.h.b16 %v306
  %v681 = vunpack.c.l.b16 %v307
  %v682 = vunpack.c.h.b16 %v307
  %v683 = vunpack.c.l.b16 %v308
  %v684 = vunpack.c.h.b16 %v308
  %v685 = vunpack.c.l.b16 %v309
  %v686 = vunpack.c.h.b16 %v309
  %v687 = vunpack.c.l.b16 %v310
  %v688 = vunpack.c.h.b16 %v310
  %v689 = vunpack.c.l.b16 %v311
  %v690 = vunpack.c.h.b16 %v311
  %v691 = vunpack.c.l.b16 %v312
  %v692 = vunpack.c.h.b16 %v312
  %v693 = vunpack.c.l.b16 %v313
  %v694 = vunpack.c.h.b16 %v313
  %v695 = vunpack.c.l.b16 %v314
  %v696 = vunpack.c.h.b16 %v314
  %v697 = vunpack.c.l.b16 %v315
  %v698 = vunpack.c.h.b16 %v315
  %v699 = vunpack.c.l.b16 %v316
  %v700 = vunpack.c.h.b16 %v316
  %v701 = vunpack.c.l.b16 %v317
  %v702 = vunpack.c.h.b16 %v317
  %v703 = vunpack.c.l.b16 %v318
  %v704 = vunpack.c.h.b16 %v318
  %v705 = vunpack.c.l.b16 %v319
  %v706 = vunpack.c.h.b16 %v319
  %v707 = vunpack.c.l.b16 %v320
  %v708 = vunpack.c.h.b16 %v320
  %v709 = vunpack.c.l.b16 %v321
  %v710 = vunpack.c.h.b16 %v321
  %v711 = vunpack.c.l.b16 %v322
  %v712 = vunpack.c.h.b16 %v322
  %v713 = vunpack.c.l.b16 %v323
  %v714 = vunpack.c.h.b16 %v323
  %v715 = vunpack.c.l.b16 %v324
  %v716 = vunpack.c.h.b16 %v324
  %v717 = vunpack.c.l.b16 %v325
  %v718 = vunpack.c.h.b16 %v325
  %v719 = vunpack.c.l.b16 %v326
  %v720 = vunpack.c.h.b16 %v326
  %v721 = vpack.c.b16 %v469, %v465
  %v722 = vpack.c.b16 %v470, %v466
  %v723 = vpack.c.b16 %v471, %v467
  %v724 = vpack.c.b16 %v472, %v468
  %v725 = vpack.c.b16 %v477, %v473
  %v726 = vpack.c.b16 %v478, %v474
  %v727 = vpack.c.b16 %v479, %v475
  %v728 = vpack.c.b16 %v480, %v476
  %v729 = vpack.c.b16 %v485, %v481
  %v730 = vpack.c.b16 %v486, %v482
  %v731 = vpack.c.b16 %v487, %v483
  %v732 = vpack.c.b16 %v488, %v484
  %v733 = vpack.c.b16 %v493, %v489
  %v734 = vpack.c.b16 %v494, %v490
  %v735 = vpack.c.b16 %v495, %v491
  %v736 = vpack.c.b16 %v496, %v492
  %v737 = vpack.c.b16 %v501, %v497
  %v738 = vpack.c.b16 %v502, %v498
  %v739 = vpack.c.b16 %v503, %v499
  %v740 = vpack.c.b16 %v504, %v500
  %v741 = vpack.c.b16 %v509, %v505
  %v742 = vpack.c.b16 %v510, %v506
  %v743 = vpack.c.b16 %v511, %v507
  %v744 = vpack.c.b16 %v512, %v508
  %v745 = vpack.c.b16 %v517, %v513
  %v746 = vpack.c.b16 %v518, %v514
  %v747 = vpack.c.b16 %v519, %v515
  %v748 = vpack.c.b16 %v520, %v516
  %v749 = vpack.c.b16 %v525, %v521
  %v750 = vpack.c.b16 %v526, %v522
  %v751 = vpack.c.b16 %v527, %v523
  %v752 = vpack.c.b16 %v528, %v524
  %v753 = vpack.c.b16 %v533, %v529
  %v754 = vpack.c.b16 %v534, %v530
  %v755 = vpack.c.b16 %v535, %v531
  %v756 = vpack.c.b16 %v536, %v532
  %v757 = vpack.c.b16 %v541, %v537
  %v758 = vpack.c.b16 %v542, %v538
  %v759 = vpack.c.b16 %v543, %v539
  %v760 = vpack.c.b16 %v544, %v540
  %v761 = vpack.c.b16 %v549, %v545
  %v762 = vpack.c.b16 %v550, %v546
  %v763 = vpack.c.b16 %v551, %v547
  %v764 = vpack.c.b16 %v552, %v548
  %v765 = vpack.c.b16 %v557, %v553
  %v766 = vpack.c.b16 %v558, %v554
  %v767 = vpack.c.b16 %v559, %v555
  %v768 = vpack.c.b16 %v560, %v556
  %v769 = vpack.c.b16 %v565, %v561
  %v770 = vpack.c.b16 %v566, %v562
  %v771 = vpack.c.b16 %v567, %v563
  %v772 = vpack.c.b16 %v568, %v564
  %v773 = vpack.c.b16 %v573, %v569
  %v774 = vpack.c.b16 %v574, %v570
  %v775 = vpack.c.b16 %v575, %v571
  %v776 = vpack.c.b16 %v576, %v572
  %v777 = vpack.c.b16 %v581, %v577
  %v778 = vpack.c.b16 %v582, %v578
  %v779 = vpack.c.b16 %v583, %v579
  %v780 = vpack.c.b16 %v584, %v580
  %v781 = vpack.c.b16 %v589, %v585
  %v782 = vpack.c.b16 %v590, %v586
  %v783 = vpack.c.b16 %v591, %v587
  %v784 = vpack.c.b16 %v592, %v588
  %v785 = vpack.c.b16 %v597, %v593
  %v786 = vpack.c.b16 %v598, %v594
  %v787 = vpack.c.b16 %v599, %v595
  %v788 = vpack.c.b16 %v600, %v596
  %v789 = vpack.c.b16 %v605, %v601
  %v790 = vpack.c.b16 %v606, %v602
  %v791 = vpack.c.b16 %v607, %v603
  %v792 = vpack.c.b16 %v608, %v604
  %v793 = vpack.c.b16 %v613, %v609
  %v794 = vpack.c.b16 %v614, %v610
  %v795 = vpack.c.b16 %v615, %v611
  %v796 = vpack.c.b16 %v616, %v612
  %v797 = vpack.c.b16 %v621, %v617
  %v798 = vpack.c.b16 %v622, %v618
  %v799 = vpack.c.b16 %v623, %v619
  %v800 = vpack.c.b16 %v624, %v620
  %v801 = vpack.c.b16 %v629, %v625
  %v802 = vpack.c.b16 %v630, %v626
  %v803 = vpack.c.b16 %v631, %v627
  %v804 = vpack.c.b16 %v632, %v628
  %v805 = vpack.c.b16 %v637, %v633
  %v806 = vpack.c.b16 %v638, %v634
  %v807 = vpack.c.b16 %v639, %v635
  %v808 = vpack.c.b16 %v640, %v636
  %v809 = vpack.c.b16 %v645, %v641
  %v810 = vpack.c.b16 %v646, %v642
  %v811 = vpack.c.b16 %v647, %v643
  %v812 = vpack.c.b16 %v648, %v644
  %v813 = vpack.c.b16 %v653, %v649
  %v814 = vpack.c.b16 %v654, %v650
  %v815 = vpack.c.b16 %v655, %v651
  %v816 = vpack.c.b16 %v656, %v652
  %v817 = vpack.c.b16 %v661, %v657
  %v818 = vpack.c.b16 %v662, %v658
  %v819 = vpack.c.b16 %v663, %v659
  %v820 = vpack.c.b16 %v664, %v660
  %v821 = vpack.c.b16 %v669, %v665
  %v822 = vpack.c.b16 %v670, %v666
  %v823 = vpack.c.b16 %v671, %v667
  %v824 = vpack.c.b16 %v672, %v668
  %v825 = vpack.c.b16 %v677, %v673
  %v826 = vpack.c.b16 %v678, %v674
  %v827 = vpack.c.b16 %v679, %v675
  %v828 = vpack.c.b16 %v680, %v676
  %v829 = vpack.c.b16 %v685, %v681
  %v830 = vpack.c.b16 %v686, %v682
  %v831 = vpack.c.b16 %v687, %v683
  %v832 = vpack.c.b16 %v688, %v684
  %v833 = vpack.c.b16 %v693, %v689
  %v834 = vpack.c.b16 %v694, %v690
  %v835 = vpack.c.b16 %v695, %v691
  %v836 = vpack.c.b16 %v696, %v692
  %v837 = vpack.c.b16 %v701, %v697
  %v838 = vpack.c.b16 %v702, %v698
  %v839 = vpack.c.b16 %v703, %v699
  %v840 = vpack.c.b16 %v704, %v700
  %v841 = vpack.c.b16 %v709, %v705
  %v842 = vpack.c.b16 %v710, %v706
  %v843 = vpack.c.b16 %v711, %v707
  %v844 = vpack.c.b16 %v712, %v708
  %v845 = vpack.c.b16 %v717, %v713
  %v846 = vpack.c.b16 %v718, %v714
  %v847 = vpack.c.b16 %v719, %v715
  %v848 = vpack.c.b16 %v720, %v716
  %977 = vmatpush.bf16.msra.mxu0 %v749
  %978 = vmatpush.bf16.msra.mxu0 %v745
  %979 = vmatpush.bf16.msra.mxu0 %v741
  %980 = vmatpush.bf16.msra.mxu0 %v737
  %981 = vmatpush.bf16.msra.mxu0 %v733
  %982 = vmatpush.bf16.msra.mxu0 %v729
  %983 = vmatpush.bf16.msra.mxu0 %v725
  %984 = vmatpush.bf16.msra.mxu0 %v721
  %985 = vmatmul.bf16.gmra.mxu0 %v195
  %v986 = vpop.f32.mrf.mxu0
  %v987 = vadd.f32 %v329, %v986
  %v988 = vpop.f32.mrf.mxu0
  %989 = vdwg.mxu0
  %990 = vmatpush.bf16.msra.mxu0 %v781
  %991 = vmatpush.bf16.msra.mxu0 %v777
  %992 = vmatpush.bf16.msra.mxu0 %v773
  %993 = vmatpush.bf16.msra.mxu0 %v769
  %994 = vmatpush.bf16.msra.mxu0 %v765
  %995 = vmatpush.bf16.msra.mxu0 %v761
  %996 = vmatpush.bf16.msra.mxu0 %v757
  %997 = vmatpush.bf16.msra.mxu0 %v753
  %998 = vmatmul.bf16.gmra.mxu0 %v196
  %v999 = vpop.f32.mrf.mxu0
  %v1000 = vadd.f32 %v987, %v999
  %v1001 = vpop.f32.mrf.mxu0
  %1002 = vdwg.mxu0
  %1003 = vmatpush.bf16.msra.mxu0 %v813
  %1004 = vmatpush.bf16.msra.mxu0 %v809
  %1005 = vmatpush.bf16.msra.mxu0 %v805
  %1006 = vmatpush.bf16.msra.mxu0 %v801
  %1007 = vmatpush.bf16.msra.mxu0 %v797
  %1008 = vmatpush.bf16.msra.mxu0 %v793
  %1009 = vmatpush.bf16.msra.mxu0 %v789
  %1010 = vmatpush.bf16.msra.mxu0 %v785
  %1011 = vmatmul.bf16.gmra.mxu0 %v197
  %v1012 = vpop.f32.mrf.mxu0
  %v1013 = vadd.f32 %v1000, %v1012
  %v1014 = vpop.f32.mrf.mxu0
  %1015 = vdwg.mxu0
  %1016 = vmatpush.bf16.msra.mxu0 %v845
  %1017 = vmatpush.bf16.msra.mxu0 %v841
  %1018 = vmatpush.bf16.msra.mxu0 %v837
  %1019 = vmatpush.bf16.msra.mxu0 %v833
  %1020 = vmatpush.bf16.msra.mxu0 %v829
  %1021 = vmatpush.bf16.msra.mxu0 %v825
  %1022 = vmatpush.bf16.msra.mxu0 %v821
  %1023 = vmatpush.bf16.msra.mxu0 %v817
  %1024 = vmatmul.bf16.gmra.mxu0 %v198
  %v1025 = vpop.f32.mrf.mxu0
  %v1026 = vadd.f32 %v1013, %v1025
  %v1027 = vpop.f32.mrf.mxu0
  %1028 = vdwg.mxu0
  %1029 = vmatpush.bf16.msra.mxu0 %v750
  %1030 = vmatpush.bf16.msra.mxu0 %v746
  %1031 = vmatpush.bf16.msra.mxu0 %v742
  %1032 = vmatpush.bf16.msra.mxu0 %v738
  %1033 = vmatpush.bf16.msra.mxu0 %v734
  %1034 = vmatpush.bf16.msra.mxu0 %v730
  %1035 = vmatpush.bf16.msra.mxu0 %v726
  %1036 = vmatpush.bf16.msra.mxu0 %v722
  %1037 = vmatmul.bf16.gmra.mxu0 %v195
  %v1038 = vpop.f32.mrf.mxu0
  %v1039 = vadd.f32 %v330, %v1038
  %v1040 = vpop.f32.mrf.mxu0
  %1041 = vdwg.mxu0
  %1042 = vmatpush.bf16.msra.mxu0 %v782
  %1043 = vmatpush.bf16.msra.mxu0 %v778
  %1044 = vmatpush.bf16.msra.mxu0 %v774
  %1045 = vmatpush.bf16.msra.mxu0 %v770
  %1046 = vmatpush.bf16.msra.mxu0 %v766
  %1047 = vmatpush.bf16.msra.mxu0 %v762
  %1048 = vmatpush.bf16.msra.mxu0 %v758
  %1049 = vmatpush.bf16.msra.mxu0 %v754
  %1050 = vmatmul.bf16.gmra.mxu0 %v196
  %v1051 = vpop.f32.mrf.mxu0
  %v1052 = vadd.f32 %v1039, %v1051
  %v1053 = vpop.f32.mrf.mxu0
  %1054 = vdwg.mxu0
  %1055 = vmatpush.bf16.msra.mxu0 %v814
  %1056 = vmatpush.bf16.msra.mxu0 %v810
  %1057 = vmatpush.bf16.msra.mxu0 %v806
  %1058 = vmatpush.bf16.msra.mxu0 %v802
  %1059 = vmatpush.bf16.msra.mxu0 %v798
  %1060 = vmatpush.bf16.msra.mxu0 %v794
  %1061 = vmatpush.bf16.msra.mxu0 %v790
  %1062 = vmatpush.bf16.msra.mxu0 %v786
  %1063 = vmatmul.bf16.gmra.mxu0 %v197
  %v1064 = vpop.f32.mrf.mxu0
  %v1065 = vadd.f32 %v1052, %v1064
  %v1066 = vpop.f32.mrf.mxu0
  %1067 = vdwg.mxu0
  %1068 = vmatpush.bf16.msra.mxu0 %v846
  %1069 = vmatpush.bf16.msra.mxu0 %v842
  %1070 = vmatpush.bf16.msra.mxu0 %v838
  %1071 = vmatpush.bf16.msra.mxu0 %v834
  %1072 = vmatpush.bf16.msra.mxu0 %v830
  %1073 = vmatpush.bf16.msra.mxu0 %v826
  %1074 = vmatpush.bf16.msra.mxu0 %v822
  %1075 = vmatpush.bf16.msra.mxu0 %v818
  %1076 = vmatmul.bf16.gmra.mxu0 %v198
  %v1077 = vpop.f32.mrf.mxu0
  %v1078 = vadd.f32 %v1065, %v1077
  %v1079 = vpop.f32.mrf.mxu0
  %1080 = vdwg.mxu0
  %1081 = vmatpush.bf16.msra.mxu0 %v751
  %1082 = vmatpush.bf16.msra.mxu0 %v747
  %1083 = vmatpush.bf16.msra.mxu0 %v743
  %1084 = vmatpush.bf16.msra.mxu0 %v739
  %1085 = vmatpush.bf16.msra.mxu0 %v735
  %1086 = vmatpush.bf16.msra.mxu0 %v731
  %1087 = vmatpush.bf16.msra.mxu0 %v727
  %1088 = vmatpush.bf16.msra.mxu0 %v723
  %1089 = vmatmul.bf16.gmra.mxu0 %v195
  %v1090 = vpop.f32.mrf.mxu0
  %v1091 = vadd.f32 %v331, %v1090
  %v1092 = vpop.f32.mrf.mxu0
  %1093 = vdwg.mxu0
  %1094 = vmatpush.bf16.msra.mxu0 %v783
  %1095 = vmatpush.bf16.msra.mxu0 %v779
  %1096 = vmatpush.bf16.msra.mxu0 %v775
  %1097 = vmatpush.bf16.msra.mxu0 %v771
  %1098 = vmatpush.bf16.msra.mxu0 %v767
  %1099 = vmatpush.bf16.msra.mxu0 %v763
  %1100 = vmatpush.bf16.msra.mxu0 %v759
  %1101 = vmatpush.bf16.msra.mxu0 %v755
  %1102 = vmatmul.bf16.gmra.mxu0 %v196
  %v1103 = vpop.f32.mrf.mxu0
  %v1104 = vadd.f32 %v1091, %v1103
  %v1105 = vpop.f32.mrf.mxu0
  %1106 = vdwg.mxu0
  %1107 = vmatpush.bf16.msra.mxu0 %v815
  %1108 = vmatpush.bf16.msra.mxu0 %v811
  %1109 = vmatpush.bf16.msra.mxu0 %v807
  %1110 = vmatpush.bf16.msra.mxu0 %v803
  %1111 = vmatpush.bf16.msra.mxu0 %v799
  %1112 = vmatpush.bf16.msra.mxu0 %v795
  %1113 = vmatpush.bf16.msra.mxu0 %v791
  %1114 = vmatpush.bf16.msra.mxu0 %v787
  %1115 = vmatmul.bf16.gmra.mxu0 %v197
  %v1116 = vpop.f32.mrf.mxu0
  %v1117 = vadd.f32 %v1104, %v1116
  %v1118 = vpop.f32.mrf.mxu0
  %1119 = vdwg.mxu0
  %1120 = vmatpush.bf16.msra.mxu0 %v847
  %1121 = vmatpush.bf16.msra.mxu0 %v843
  %1122 = vmatpush.bf16.msra.mxu0 %v839
  %1123 = vmatpush.bf16.msra.mxu0 %v835
  %1124 = vmatpush.bf16.msra.mxu0 %v831
  %1125 = vmatpush.bf16.msra.mxu0 %v827
  %1126 = vmatpush.bf16.msra.mxu0 %v823
  %1127 = vmatpush.bf16.msra.mxu0 %v819
  %1128 = vmatmul.bf16.gmra.mxu0 %v198
  %v1129 = vpop.f32.mrf.mxu0
  %v1130 = vadd.f32 %v1117, %v1129
  %v1131 = vpop.f32.mrf.mxu0
  %1132 = vdwg.mxu0
  %1133 = vmatpush.bf16.msra.mxu0 %v752
  %1134 = vmatpush.bf16.msra.mxu0 %v748
  %1135 = vmatpush.bf16.msra.mxu0 %v744
  %1136 = vmatpush.bf16.msra.mxu0 %v740
  %1137 = vmatpush.bf16.msra.mxu0 %v736
  %1138 = vmatpush.bf16.msra.mxu0 %v732
  %1139 = vmatpush.bf16.msra.mxu0 %v728
  %1140 = vmatpush.bf16.msra.mxu0 %v724
  %1141 = vmatmul.bf16.gmra.mxu0 %v195
  %v1142 = vpop.f32.mrf.mxu0
  %v1143 = vadd.f32 %v332, %v1142
  %v1144 = vpop.f32.mrf.mxu0
  %1145 = vdwg.mxu0
  %1146 = vmatpush.bf16.msra.mxu0 %v784
  %1147 = vmatpush.bf16.msra.mxu0 %v780
  %1148 = vmatpush.bf16.msra.mxu0 %v776
  %1149 = vmatpush.bf16.msra.mxu0 %v772
  %1150 = vmatpush.bf16.msra.mxu0 %v768
  %1151 = vmatpush.bf16.msra.mxu0 %v764
  %1152 = vmatpush.bf16.msra.mxu0 %v760
  %1153 = vmatpush.bf16.msra.mxu0 %v756
  %1154 = vmatmul.bf16.gmra.mxu0 %v196
  %v1155 = vpop.f32.mrf.mxu0
  %v1156 = vadd.f32 %v1143, %v1155
  %v1157 = vpop.f32.mrf.mxu0
  %1158 = vdwg.mxu0
  %1159 = vmatpush.bf16.msra.mxu0 %v816
  %1160 = vmatpush.bf16.msra.mxu0 %v812
  %1161 = vmatpush.bf16.msra.mxu0 %v808
  %1162 = vmatpush.bf16.msra.mxu0 %v804
  %1163 = vmatpush.bf16.msra.mxu0 %v800
  %1164 = vmatpush.bf16.msra.mxu0 %v796
  %1165 = vmatpush.bf16.msra.mxu0 %v792
  %1166 = vmatpush.bf16.msra.mxu0 %v788
  %1167 = vmatmul.bf16.gmra.mxu0 %v197
  %v1168 = vpop.f32.mrf.mxu0
  %v1169 = vadd.f32 %v1156, %v1168
  %v1170 = vpop.f32.mrf.mxu0
  %1171 = vdwg.mxu0
  %1172 = vmatpush.bf16.msra.mxu0 %v848
  %1173 = vmatpush.bf16.msra.mxu0 %v844
  %1174 = vmatpush.bf16.msra.mxu0 %v840
  %1175 = vmatpush.bf16.msra.mxu0 %v836
  %1176 = vmatpush.bf16.msra.mxu0 %v832
  %1177 = vmatpush.bf16.msra.mxu0 %v828
  %1178 = vmatpush.bf16.msra.mxu0 %v824
  %1179 = vmatpush.bf16.msra.mxu0 %v820
  %1180 = vmatmul.bf16.gmra.mxu0 %v198
  %v1181 = vpop.f32.mrf.mxu0
  %v1182 = vadd.f32 %v1169, %v1181
  %v1183 = vpop.f32.mrf.mxu0
  %1184 = vdwg.mxu0
  %v1185 = vmax.f32 %v1026, 0.0
  %v1186 = vmax.f32 %v1078, 0.0
  %v1187 = vmax.f32 %v1130, 0.0
  %v1188 = vmax.f32 %v1182, 0.0
  %v1189 = vpack.c.bf16 %v1185, %v1185
  %v1190 = vpack.c.bf16 %v1186, %v1186
  %v1191 = vpack.c.bf16 %v1187, %v1187
  %v1192 = vpack.c.bf16 %v1188, %v1188
  %v1193 = vld [vmem:[%s3] sm:$0xff]
  %v1194 = vld [vmem:[%s3 + $0x8] sm:$0xf]
  %v1195 = vld [vmem:[%s3 + $0xc] sm:$0xff]
  %v1196 = vld [vmem:[%s3 + $0x14] sm:$0xf]
  %v1197 = vld [vmem:[%s3 + $0x18] sm:$0xff]
  %v1198 = vld [vmem:[%s3 + $0x20] sm:$0xf]
  %v1199 = vld [vmem:[%s3 + $0x24] sm:$0xff]
  %v1200 = vld [vmem:[%s3 + $0x2c] sm:$0xf]
  %v1201 = vld [vmem:[%s3 + $0x30] sm:$0xff]
  %v1202 = vld [vmem:[%s3 + $0x38] sm:$0xf]
  %v1203 = vld [vmem:[%s3 + $0x3c] sm:$0xff]
  %v1204 = vld [vmem:[%s3 + $0x44] sm:$0xf]
  %v1205 = vld [vmem:[%s3 + $0x48] sm:$0xff]
  %v1206 = vld [vmem:[%s3 + $0x50] sm:$0xf]
  %v1207 = vld [vmem:[%s3 + $0x54] sm:$0xff]
  %v1208 = vld [vmem:[%s3 + $0x5c] sm:$0xf]
  %v1209 = vld [vmem:[%s3 + $0x60] sm:$0xff]
  %v1210 = vld [vmem:[%s3 + $0x68] sm:$0xf]
  %v1211 = vld [vmem:[%s3 + $0x6c] sm:$0xff]
  %v1212 = vld [vmem:[%s3 + $0x74] sm:$0xf]
  %v1213 = vld [vmem:[%s3 + $0x78] sm:$0xff]
  %v1214 = vld [vmem:[%s3 + $0x80] sm:$0xf]
  %v1215 = vld [vmem:[%s3 + $0x84] sm:$0xff]
  %v1216 = vld [vmem:[%s3 + $0x8c] sm:$0xf]
  %v1217 = vld [vmem:[%s3 + $0x90] sm:$0xff]
  %v1218 = vld [vmem:[%s3 + $0x98] sm:$0xf]
  %v1219 = vld [vmem:[%s3 + $0x9c] sm:$0xff]
  %v1220 = vld [vmem:[%s3 + $0xa4] sm:$0xf]
  %v1221 = vld [vmem:[%s3 + $0xa8] sm:$0xff]
  %v1222 = vld [vmem:[%s3 + $0xb0] sm:$0xf]
  %v1223 = vld [vmem:[%s3 + $0xb4] sm:$0xff]
  %v1224 = vld [vmem:[%s3 + $0xbc] sm:$0xf]
  %v1225 = vld [vmem:[%s3 + $0xc0] sm:$0xff]
  %v1226 = vld [vmem:[%s3 + $0xc8] sm:$0xf]
  %v1227 = vld [vmem:[%s3 + $0xcc] sm:$0xff]
  %v1228 = vld [vmem:[%s3 + $0xd4] sm:$0xf]
  %v1229 = vld [vmem:[%s3 + $0xd8] sm:$0xff]
  %v1230 = vld [vmem:[%s3 + $0xe0] sm:$0xf]
  %v1231 = vld [vmem:[%s3 + $0xe4] sm:$0xff]
  %v1232 = vld [vmem:[%s3 + $0xec] sm:$0xf]
  %v1233 = vld [vmem:[%s3 + $0xf0] sm:$0xff]
  %v1234 = vld [vmem:[%s3 + $0xf8] sm:$0xf]
  %v1235 = vld [vmem:[%s3 + $0xfc] sm:$0xff]
  %v1236 = vld [vmem:[%s3 + $0x104] sm:$0xf]
  %v1237 = vld [vmem:[%s3 + $0x108] sm:$0xff]
  %v1238 = vld [vmem:[%s3 + $0x110] sm:$0xf]
  %v1239 = vld [vmem:[%s3 + $0x114] sm:$0xff]
  %v1240 = vld [vmem:[%s3 + $0x11c] sm:$0xf]
  %v1241 = vld [vmem:[%s3 + $0x120] sm:$0xff]
  %v1242 = vld [vmem:[%s3 + $0x128] sm:$0xf]
  %v1243 = vld [vmem:[%s3 + $0x12c] sm:$0xff]
  %v1244 = vld [vmem:[%s3 + $0x134] sm:$0xf]
  %v1245 = vld [vmem:[%s3 + $0x138] sm:$0xff]
  %v1246 = vld [vmem:[%s3 + $0x140] sm:$0xf]
  %v1247 = vld [vmem:[%s3 + $0x144] sm:$0xff]
  %v1248 = vld [vmem:[%s3 + $0x14c] sm:$0xf]
  %v1249 = vld [vmem:[%s3 + $0x150] sm:$0xff]
  %v1250 = vld [vmem:[%s3 + $0x158] sm:$0xf]
  %v1251 = vld [vmem:[%s3 + $0x15c] sm:$0xff]
  %v1252 = vld [vmem:[%s3 + $0x164] sm:$0xf]
  %v1253 = vld [vmem:[%s3 + $0x168] sm:$0xff]
  %v1254 = vld [vmem:[%s3 + $0x170] sm:$0xf]
  %v1255 = vld [vmem:[%s3 + $0x174] sm:$0xff]
  %v1256 = vld [vmem:[%s3 + $0x17c] sm:$0xf]
  %v1257 = vld [vmem:[%s3 + $0x180] sm:$0xff]
  %v1258 = vld [vmem:[%s3 + $0x188] sm:$0xf]
  %v1259 = vld [vmem:[%s3 + $0x18c] sm:$0xff]
  %v1260 = vld [vmem:[%s3 + $0x194] sm:$0xf]
  %v1261 = vld [vmem:[%s3 + $0x198] sm:$0xff]
  %v1262 = vld [vmem:[%s3 + $0x1a0] sm:$0xf]
  %v1263 = vld [vmem:[%s3 + $0x1a4] sm:$0xff]
  %v1264 = vld [vmem:[%s3 + $0x1ac] sm:$0xf]
  %v1265 = vld [vmem:[%s3 + $0x1b0] sm:$0xff]
  %v1266 = vld [vmem:[%s3 + $0x1b8] sm:$0xf]
  %v1267 = vld [vmem:[%s3 + $0x1bc] sm:$0xff]
  %v1268 = vld [vmem:[%s3 + $0x1c4] sm:$0xf]
  %v1269 = vld [vmem:[%s3 + $0x1c8] sm:$0xff]
  %v1270 = vld [vmem:[%s3 + $0x1d0] sm:$0xf]
  %v1271 = vld [vmem:[%s3 + $0x1d4] sm:$0xff]
  %v1272 = vld [vmem:[%s3 + $0x1dc] sm:$0xf]
  %v1273 = vld [vmem:[%s3 + $0x1e0] sm:$0xff]
  %v1274 = vld [vmem:[%s3 + $0x1e8] sm:$0xf]
  %v1275 = vld [vmem:[%s3 + $0x1ec] sm:$0xff]
  %v1276 = vld [vmem:[%s3 + $0x1f4] sm:$0xf]
  %v1277 = vld [vmem:[%s3 + $0x1f8] sm:$0xff]
  %v1278 = vld [vmem:[%s3 + $0x200] sm:$0xf]
  %v1279 = vld [vmem:[%s3 + $0x204] sm:$0xff]
  %v1280 = vld [vmem:[%s3 + $0x20c] sm:$0xf]
  %v1281 = vld [vmem:[%s3 + $0x210] sm:$0xff]
  %v1282 = vld [vmem:[%s3 + $0x218] sm:$0xf]
  %v1283 = vld [vmem:[%s3 + $0x21c] sm:$0xff]
  %v1284 = vld [vmem:[%s3 + $0x224] sm:$0xf]
  %v1285 = vld [vmem:[%s3 + $0x228] sm:$0xff]
  %v1286 = vld [vmem:[%s3 + $0x230] sm:$0xf]
  %v1287 = vld [vmem:[%s3 + $0x234] sm:$0xff]
  %v1288 = vld [vmem:[%s3 + $0x23c] sm:$0xf]
  %v1289 = vld [vmem:[%s3 + $0x240] sm:$0xff]
  %v1290 = vld [vmem:[%s3 + $0x248] sm:$0xf]
  %v1291 = vld [vmem:[%s3 + $0x24c] sm:$0xff]
  %v1292 = vld [vmem:[%s3 + $0x254] sm:$0xf]
  %v1293 = vld [vmem:[%s3 + $0x258] sm:$0xff]
  %v1294 = vld [vmem:[%s3 + $0x260] sm:$0xf]
  %v1295 = vld [vmem:[%s3 + $0x264] sm:$0xff]
  %v1296 = vld [vmem:[%s3 + $0x26c] sm:$0xf]
  %v1297 = vld [vmem:[%s3 + $0x270] sm:$0xff]
  %v1298 = vld [vmem:[%s3 + $0x278] sm:$0xf]
  %v1299 = vld [vmem:[%s3 + $0x27c] sm:$0xff]
  %v1300 = vld [vmem:[%s3 + $0x284] sm:$0xf]
  %v1301 = vld [vmem:[%s3 + $0x288] sm:$0xff]
  %v1302 = vld [vmem:[%s3 + $0x290] sm:$0xf]
  %v1303 = vld [vmem:[%s3 + $0x294] sm:$0xff]
  %v1304 = vld [vmem:[%s3 + $0x29c] sm:$0xf]
  %v1305 = vld [vmem:[%s6 + $0x8] sm:$0x7]
  %v1307 = vperm.slane %v1305, 0
  %v1308 = vperm.slane %v1305, 1
  %v1309 = vperm.slane %v1305, 2
  %v1425 = vunpack.c.l.b16 %v1193
  %v1426 = vunpack.c.h.b16 %v1193
  %v1427 = vunpack.c.l.b16 %v1194
  %v1428 = vunpack.c.l.b16 %v1195
  %v1429 = vunpack.c.h.b16 %v1195
  %v1430 = vunpack.c.l.b16 %v1196
  %v1431 = vunpack.c.l.b16 %v1197
  %v1432 = vunpack.c.h.b16 %v1197
  %v1433 = vunpack.c.l.b16 %v1198
  %v1434 = vunpack.c.l.b16 %v1199
  %v1435 = vunpack.c.h.b16 %v1199
  %v1436 = vunpack.c.l.b16 %v1200
  %v1437 = vunpack.c.l.b16 %v1201
  %v1438 = vunpack.c.h.b16 %v1201
  %v1439 = vunpack.c.l.b16 %v1202
  %v1440 = vunpack.c.l.b16 %v1203
  %v1441 = vunpack.c.h.b16 %v1203
  %v1442 = vunpack.c.l.b16 %v1204
  %v1443 = vunpack.c.l.b16 %v1205
  %v1444 = vunpack.c.h.b16 %v1205
  %v1445 = vunpack.c.l.b16 %v1206
  %v1446 = vunpack.c.l.b16 %v1207
  %v1447 = vunpack.c.h.b16 %v1207
  %v1448 = vunpack.c.l.b16 %v1208
  %v1449 = vunpack.c.l.b16 %v1209
  %v1450 = vunpack.c.h.b16 %v1209
  %v1451 = vunpack.c.l.b16 %v1210
  %v1452 = vunpack.c.l.b16 %v1211
  %v1453 = vunpack.c.h.b16 %v1211
  %v1454 = vunpack.c.l.b16 %v1212
  %v1455 = vunpack.c.l.b16 %v1213
  %v1456 = vunpack.c.h.b16 %v1213
  %v1457 = vunpack.c.l.b16 %v1214
  %v1458 = vunpack.c.l.b16 %v1215
  %v1459 = vunpack.c.h.b16 %v1215
  %v1460 = vunpack.c.l.b16 %v1216
  %v1461 = vunpack.c.l.b16 %v1217
  %v1462 = vunpack.c.h.b16 %v1217
  %v1463 = vunpack.c.l.b16 %v1218
  %v1464 = vunpack.c.l.b16 %v1219
  %v1465 = vunpack.c.h.b16 %v1219
  %v1466 = vunpack.c.l.b16 %v1220
  %v1467 = vunpack.c.l.b16 %v1221
  %v1468 = vunpack.c.h.b16 %v1221
  %v1469 = vunpack.c.l.b16 %v1222
  %v1470 = vunpack.c.l.b16 %v1223
  %v1471 = vunpack.c.h.b16 %v1223
  %v1472 = vunpack.c.l.b16 %v1224
  %v1473 = vunpack.c.l.b16 %v1225
  %v1474 = vunpack.c.h.b16 %v1225
  %v1475 = vunpack.c.l.b16 %v1226
  %v1476 = vunpack.c.l.b16 %v1227
  %v1477 = vunpack.c.h.b16 %v1227
  %v1478 = vunpack.c.l.b16 %v1228
  %v1479 = vunpack.c.l.b16 %v1229
  %v1480 = vunpack.c.h.b16 %v1229
  %v1481 = vunpack.c.l.b16 %v1230
  %v1482 = vunpack.c.l.b16 %v1231
  %v1483 = vunpack.c.h.b16 %v1231
  %v1484 = vunpack.c.l.b16 %v1232
  %v1485 = vunpack.c.l.b16 %v1233
  %v1486 = vunpack.c.h.b16 %v1233
  %v1487 = vunpack.c.l.b16 %v1234
  %v1488 = vunpack.c.l.b16 %v1235
  %v1489 = vunpack.c.h.b16 %v1235
  %v1490 = vunpack.c.l.b16 %v1236
  %v1491 = vunpack.c.l.b16 %v1237
  %v1492 = vunpack.c.h.b16 %v1237
  %v1493 = vunpack.c.l.b16 %v1238
  %v1494 = vunpack.c.l.b16 %v1239
  %v1495 = vunpack.c.h.b16 %v1239
  %v1496 = vunpack.c.l.b16 %v1240
  %v1497 = vunpack.c.l.b16 %v1241
  %v1498 = vunpack.c.h.b16 %v1241
  %v1499 = vunpack.c.l.b16 %v1242
  %v1500 = vunpack.c.l.b16 %v1243
  %v1501 = vunpack.c.h.b16 %v1243
  %v1502 = vunpack.c.l.b16 %v1244
  %v1503 = vunpack.c.l.b16 %v1245
  %v1504 = vunpack.c.h.b16 %v1245
  %v1505 = vunpack.c.l.b16 %v1246
  %v1506 = vunpack.c.l.b16 %v1247
  %v1507 = vunpack.c.h.b16 %v1247
  %v1508 = vunpack.c.l.b16 %v1248
  %v1509 = vunpack.c.l.b16 %v1249
  %v1510 = vunpack.c.h.b16 %v1249
  %v1511 = vunpack.c.l.b16 %v1250
  %v1512 = vunpack.c.l.b16 %v1251
  %v1513 = vunpack.c.h.b16 %v1251
  %v1514 = vunpack.c.l.b16 %v1252
  %v1515 = vunpack.c.l.b16 %v1253
  %v1516 = vunpack.c.h.b16 %v1253
  %v1517 = vunpack.c.l.b16 %v1254
  %v1518 = vunpack.c.l.b16 %v1255
  %v1519 = vunpack.c.h.b16 %v1255
  %v1520 = vunpack.c.l.b16 %v1256
  %v1521 = vunpack.c.l.b16 %v1257
  %v1522 = vunpack.c.h.b16 %v1257
  %v1523 = vunpack.c.l.b16 %v1258
  %v1524 = vunpack.c.l.b16 %v1259
  %v1525 = vunpack.c.h.b16 %v1259
  %v1526 = vunpack.c.l.b16 %v1260
  %v1527 = vunpack.c.l.b16 %v1261
  %v1528 = vunpack.c.h.b16 %v1261
  %v1529 = vunpack.c.l.b16 %v1262
  %v1530 = vunpack.c.l.b16 %v1263
  %v1531 = vunpack.c.h.b16 %v1263
  %v1532 = vunpack.c.l.b16 %v1264
  %v1533 = vunpack.c.l.b16 %v1265
  %v1534 = vunpack.c.h.b16 %v1265
  %v1535 = vunpack.c.l.b16 %v1266
  %v1536 = vunpack.c.l.b16 %v1267
  %v1537 = vunpack.c.h.b16 %v1267
  %v1538 = vunpack.c.l.b16 %v1268
  %v1539 = vunpack.c.l.b16 %v1269
  %v1540 = vunpack.c.h.b16 %v1269
  %v1541 = vunpack.c.l.b16 %v1270
  %v1542 = vunpack.c.l.b16 %v1271
  %v1543 = vunpack.c.h.b16 %v1271
  %v1544 = vunpack.c.l.b16 %v1272
  %v1545 = vunpack.c.l.b16 %v1273
  %v1546 = vunpack.c.h.b16 %v1273
  %v1547 = vunpack.c.l.b16 %v1274
  %v1548 = vunpack.c.l.b16 %v1275
  %v1549 = vunpack.c.h.b16 %v1275
  %v1550 = vunpack.c.l.b16 %v1276
  %v1551 = vunpack.c.l.b16 %v1277
  %v1552 = vunpack.c.h.b16 %v1277
  %v1553 = vunpack.c.l.b16 %v1278
  %v1554 = vunpack.c.l.b16 %v1279
  %v1555 = vunpack.c.h.b16 %v1279
  %v1556 = vunpack.c.l.b16 %v1280
  %v1557 = vunpack.c.l.b16 %v1281
  %v1558 = vunpack.c.h.b16 %v1281
  %v1559 = vunpack.c.l.b16 %v1282
  %v1560 = vunpack.c.l.b16 %v1283
  %v1561 = vunpack.c.h.b16 %v1283
  %v1562 = vunpack.c.l.b16 %v1284
  %v1563 = vunpack.c.l.b16 %v1285
  %v1564 = vunpack.c.h.b16 %v1285
  %v1565 = vunpack.c.l.b16 %v1286
  %v1566 = vunpack.c.l.b16 %v1287
  %v1567 = vunpack.c.h.b16 %v1287
  %v1568 = vunpack.c.l.b16 %v1288
  %v1569 = vunpack.c.l.b16 %v1289
  %v1570 = vunpack.c.h.b16 %v1289
  %v1571 = vunpack.c.l.b16 %v1290
  %v1572 = vunpack.c.l.b16 %v1291
  %v1573 = vunpack.c.h.b16 %v1291
  %v1574 = vunpack.c.l.b16 %v1292
  %v1575 = vunpack.c.l.b16 %v1293
  %v1576 = vunpack.c.h.b16 %v1293
  %v1577 = vunpack.c.l.b16 %v1294
  %v1578 = vunpack.c.l.b16 %v1295
  %v1579 = vunpack.c.h.b16 %v1295
  %v1580 = vunpack.c.l.b16 %v1296
  %v1581 = vunpack.c.l.b16 %v1297
  %v1582 = vunpack.c.h.b16 %v1297
  %v1583 = vunpack.c.l.b16 %v1298
  %v1584 = vunpack.c.l.b16 %v1299
  %v1585 = vunpack.c.h.b16 %v1299
  %v1586 = vunpack.c.l.b16 %v1300
  %v1587 = vunpack.c.l.b16 %v1301
  %v1588 = vunpack.c.h.b16 %v1301
  %v1589 = vunpack.c.l.b16 %v1302
  %v1590 = vunpack.c.l.b16 %v1303
  %v1591 = vunpack.c.h.b16 %v1303
  %v1592 = vunpack.c.l.b16 %v1304
  %v1593 = vpack.c.b16 %v1428, %v1425
  %v1594 = vpack.c.b16 %v1429, %v1426
  %v1595 = vpack.c.b16 %v1430, %v1427
  %v1596 = vpack.c.b16 %v1434, %v1431
  %v1597 = vpack.c.b16 %v1435, %v1432
  %v1598 = vpack.c.b16 %v1436, %v1433
  %v1599 = vpack.c.b16 %v1440, %v1437
  %v1600 = vpack.c.b16 %v1441, %v1438
  %v1601 = vpack.c.b16 %v1442, %v1439
  %v1602 = vpack.c.b16 %v1446, %v1443
  %v1603 = vpack.c.b16 %v1447, %v1444
  %v1604 = vpack.c.b16 %v1448, %v1445
  %v1605 = vpack.c.b16 %v1452, %v1449
  %v1606 = vpack.c.b16 %v1453, %v1450
  %v1607 = vpack.c.b16 %v1454, %v1451
  %v1608 = vpack.c.b16 %v1458, %v1455
  %v1609 = vpack.c.b16 %v1459, %v1456
  %v1610 = vpack.c.b16 %v1460, %v1457
  %v1611 = vpack.c.b16 %v1464, %v1461
  %v1612 = vpack.c.b16 %v1465, %v1462
  %v1613 = vpack.c.b16 %v1466, %v1463
  %v1614 = vpack.c.b16 %v1470, %v1467
  %v1615 = vpack.c.b16 %v1471, %v1468
  %v1616 = vpack.c.b16 %v1472, %v1469
  %v1617 = vpack.c.b16 %v1476, %v1473
  %v1618 = vpack.c.b16 %v1477, %v1474
  %v1619 = vpack.c.b16 %v1478, %v1475
  %v1620 = vpack.c.b16 %v1482, %v1479
  %v1621 = vpack.c.b16 %v1483, %v1480
  %v1622 = vpack.c.b16 %v1484, %v1481
  %v1623 = vpack.c.b16 %v1488, %v1485
  %v1624 = vpack.c.b16 %v1489, %v1486
  %v1625 = vpack.c.b16 %v1490, %v1487
  %v1626 = vpack.c.b16 %v1494, %v1491
  %v1627 = vpack.c.b16 %v1495, %v1492
  %v1628 = vpack.c.b16 %v1496, %v1493
  %v1629 = vpack.c.b16 %v1500, %v1497
  %v1630 = vpack.c.b16 %v1501, %v1498
  %v1631 = vpack.c.b16 %v1502, %v1499
  %v1632 = vpack.c.b16 %v1506, %v1503
  %v1633 = vpack.c.b16 %v1507, %v1504
  %v1634 = vpack.c.b16 %v1508, %v1505
  %v1635 = vpack.c.b16 %v1512, %v1509
  %v1636 = vpack.c.b16 %v1513, %v1510
  %v1637 = vpack.c.b16 %v1514, %v1511
  %v1638 = vpack.c.b16 %v1518, %v1515
  %v1639 = vpack.c.b16 %v1519, %v1516
  %v1640 = vpack.c.b16 %v1520, %v1517
  %v1641 = vpack.c.b16 %v1524, %v1521
  %v1642 = vpack.c.b16 %v1525, %v1522
  %v1643 = vpack.c.b16 %v1526, %v1523
  %v1644 = vpack.c.b16 %v1530, %v1527
  %v1645 = vpack.c.b16 %v1531, %v1528
  %v1646 = vpack.c.b16 %v1532, %v1529
  %v1647 = vpack.c.b16 %v1536, %v1533
  %v1648 = vpack.c.b16 %v1537, %v1534
  %v1649 = vpack.c.b16 %v1538, %v1535
  %v1650 = vpack.c.b16 %v1542, %v1539
  %v1651 = vpack.c.b16 %v1543, %v1540
  %v1652 = vpack.c.b16 %v1544, %v1541
  %v1653 = vpack.c.b16 %v1548, %v1545
  %v1654 = vpack.c.b16 %v1549, %v1546
  %v1655 = vpack.c.b16 %v1550, %v1547
  %v1656 = vpack.c.b16 %v1554, %v1551
  %v1657 = vpack.c.b16 %v1555, %v1552
  %v1658 = vpack.c.b16 %v1556, %v1553
  %v1659 = vpack.c.b16 %v1560, %v1557
  %v1660 = vpack.c.b16 %v1561, %v1558
  %v1661 = vpack.c.b16 %v1562, %v1559
  %v1662 = vpack.c.b16 %v1566, %v1563
  %v1663 = vpack.c.b16 %v1567, %v1564
  %v1664 = vpack.c.b16 %v1568, %v1565
  %v1665 = vpack.c.b16 %v1572, %v1569
  %v1666 = vpack.c.b16 %v1573, %v1570
  %v1667 = vpack.c.b16 %v1574, %v1571
  %v1668 = vpack.c.b16 %v1578, %v1575
  %v1669 = vpack.c.b16 %v1579, %v1576
  %v1670 = vpack.c.b16 %v1580, %v1577
  %v1671 = vpack.c.b16 %v1584, %v1581
  %v1672 = vpack.c.b16 %v1585, %v1582
  %v1673 = vpack.c.b16 %v1586, %v1583
  %v1674 = vpack.c.b16 %v1590, %v1587
  %v1675 = vpack.c.b16 %v1591, %v1588
  %v1676 = vpack.c.b16 %v1592, %v1589
  %v1762 = vsel %vm135, %v1192, 0
  %1764 = vmatpush.bf16.msra.mxu0 %v1614
  %1765 = vmatpush.bf16.msra.mxu0 %v1611
  %1766 = vmatpush.bf16.msra.mxu0 %v1608
  %1767 = vmatpush.bf16.msra.mxu0 %v1605
  %1768 = vmatpush.bf16.msra.mxu0 %v1602
  %1769 = vmatpush.bf16.msra.mxu0 %v1599
  %1770 = vmatpush.bf16.msra.mxu0 %v1596
  %1771 = vmatpush.bf16.msra.mxu0 %v1593
  %1772 = vmatmul.bf16.gmra.mxu0 %v1189
  %v1773 = vpop.f32.mrf.mxu0
  %v1774 = vadd.f32 %v1307, %v1773
  %v1775 = vpop.f32.mrf.mxu0
  %1776 = vdwg.mxu0
  %1777 = vmatpush.bf16.msra.mxu0 %v1638
  %1778 = vmatpush.bf16.msra.mxu0 %v1635
  %1779 = vmatpush.bf16.msra.mxu0 %v1632
  %1780 = vmatpush.bf16.msra.mxu0 %v1629
  %1781 = vmatpush.bf16.msra.mxu0 %v1626
  %1782 = vmatpush.bf16.msra.mxu0 %v1623
  %1783 = vmatpush.bf16.msra.mxu0 %v1620
  %1784 = vmatpush.bf16.msra.mxu0 %v1617
  %1785 = vmatmul.bf16.gmra.mxu0 %v1190
  %v1786 = vpop.f32.mrf.mxu0
  %v1787 = vadd.f32 %v1774, %v1786
  %v1788 = vpop.f32.mrf.mxu0
  %1789 = vdwg.mxu0
  %1790 = vmatpush.bf16.msra.mxu0 %v1662
  %1791 = vmatpush.bf16.msra.mxu0 %v1659
  %1792 = vmatpush.bf16.msra.mxu0 %v1656
  %1793 = vmatpush.bf16.msra.mxu0 %v1653
  %1794 = vmatpush.bf16.msra.mxu0 %v1650
  %1795 = vmatpush.bf16.msra.mxu0 %v1647
  %1796 = vmatpush.bf16.msra.mxu0 %v1644
  %1797 = vmatpush.bf16.msra.mxu0 %v1641
  %1798 = vmatmul.bf16.gmra.mxu0 %v1191
  %v1799 = vpop.f32.mrf.mxu0
  %v1800 = vadd.f32 %v1787, %v1799
  %v1801 = vpop.f32.mrf.mxu0
  %1802 = vdwg.mxu0
  %1803 = vmatpush.bf16.msra.mxu0 0
  %1804 = vmatpush.bf16.msra.mxu0 0
  %1805 = vmatpush.bf16.msra.mxu0 0
  %1806 = vmatpush.bf16.msra.mxu0 0
  %1807 = vmatpush.bf16.msra.mxu0 %v1674
  %1808 = vmatpush.bf16.msra.mxu0 %v1671
  %1809 = vmatpush.bf16.msra.mxu0 %v1668
  %1810 = vmatpush.bf16.msra.mxu0 %v1665
  %1811 = vmatmul.bf16.gmra.mxu0 %v1762
  %v1812 = vpop.f32.mrf.mxu0
  %v1813 = vadd.f32 %v1800, %v1812
  %v1814 = vpop.f32.mrf.mxu0
  %1815 = vdwg.mxu0
  %1816 = vmatpush.bf16.msra.mxu0 %v1615
  %1817 = vmatpush.bf16.msra.mxu0 %v1612
  %1818 = vmatpush.bf16.msra.mxu0 %v1609
  %1819 = vmatpush.bf16.msra.mxu0 %v1606
  %1820 = vmatpush.bf16.msra.mxu0 %v1603
  %1821 = vmatpush.bf16.msra.mxu0 %v1600
  %1822 = vmatpush.bf16.msra.mxu0 %v1597
  %1823 = vmatpush.bf16.msra.mxu0 %v1594
  %1824 = vmatmul.bf16.gmra.mxu0 %v1189
  %v1825 = vpop.f32.mrf.mxu0
  %v1826 = vadd.f32 %v1308, %v1825
  %v1827 = vpop.f32.mrf.mxu0
  %1828 = vdwg.mxu0
  %1829 = vmatpush.bf16.msra.mxu0 %v1639
  %1830 = vmatpush.bf16.msra.mxu0 %v1636
  %1831 = vmatpush.bf16.msra.mxu0 %v1633
  %1832 = vmatpush.bf16.msra.mxu0 %v1630
  %1833 = vmatpush.bf16.msra.mxu0 %v1627
  %1834 = vmatpush.bf16.msra.mxu0 %v1624
  %1835 = vmatpush.bf16.msra.mxu0 %v1621
  %1836 = vmatpush.bf16.msra.mxu0 %v1618
  %1837 = vmatmul.bf16.gmra.mxu0 %v1190
  %v1838 = vpop.f32.mrf.mxu0
  %v1839 = vadd.f32 %v1826, %v1838
  %v1840 = vpop.f32.mrf.mxu0
  %1841 = vdwg.mxu0
  %1842 = vmatpush.bf16.msra.mxu0 %v1663
  %1843 = vmatpush.bf16.msra.mxu0 %v1660
  %1844 = vmatpush.bf16.msra.mxu0 %v1657
  %1845 = vmatpush.bf16.msra.mxu0 %v1654
  %1846 = vmatpush.bf16.msra.mxu0 %v1651
  %1847 = vmatpush.bf16.msra.mxu0 %v1648
  %1848 = vmatpush.bf16.msra.mxu0 %v1645
  %1849 = vmatpush.bf16.msra.mxu0 %v1642
  %1850 = vmatmul.bf16.gmra.mxu0 %v1191
  %v1851 = vpop.f32.mrf.mxu0
  %v1852 = vadd.f32 %v1839, %v1851
  %v1853 = vpop.f32.mrf.mxu0
  %1854 = vdwg.mxu0
  %1855 = vmatpush.bf16.msra.mxu0 0
  %1856 = vmatpush.bf16.msra.mxu0 0
  %1857 = vmatpush.bf16.msra.mxu0 0
  %1858 = vmatpush.bf16.msra.mxu0 0
  %1859 = vmatpush.bf16.msra.mxu0 %v1675
  %1860 = vmatpush.bf16.msra.mxu0 %v1672
  %1861 = vmatpush.bf16.msra.mxu0 %v1669
  %1862 = vmatpush.bf16.msra.mxu0 %v1666
  %1863 = vmatmul.bf16.gmra.mxu0 %v1762
  %v1864 = vpop.f32.mrf.mxu0
  %v1865 = vadd.f32 %v1852, %v1864
  %v1866 = vpop.f32.mrf.mxu0
  %1867 = vdwg.mxu0
  %1868 = vmatpush.bf16.msra.mxu0 %v1616
  %1869 = vmatpush.bf16.msra.mxu0 %v1613
  %1870 = vmatpush.bf16.msra.mxu0 %v1610
  %1871 = vmatpush.bf16.msra.mxu0 %v1607
  %1872 = vmatpush.bf16.msra.mxu0 %v1604
  %1873 = vmatpush.bf16.msra.mxu0 %v1601
  %1874 = vmatpush.bf16.msra.mxu0 %v1598
  %1875 = vmatpush.bf16.msra.mxu0 %v1595
  %1876 = vmatmul.bf16.gmra.mxu0 %v1189
  %v1877 = vpop.f32.mrf.mxu0
  %v1878 = vadd.f32 %v1309, %v1877
  %v1879 = vpop.f32.mrf.mxu0
  %1880 = vdwg.mxu0
  %1881 = vmatpush.bf16.msra.mxu0 %v1640
  %1882 = vmatpush.bf16.msra.mxu0 %v1637
  %1883 = vmatpush.bf16.msra.mxu0 %v1634
  %1884 = vmatpush.bf16.msra.mxu0 %v1631
  %1885 = vmatpush.bf16.msra.mxu0 %v1628
  %1886 = vmatpush.bf16.msra.mxu0 %v1625
  %1887 = vmatpush.bf16.msra.mxu0 %v1622
  %1888 = vmatpush.bf16.msra.mxu0 %v1619
  %1889 = vmatmul.bf16.gmra.mxu0 %v1190
  %v1890 = vpop.f32.mrf.mxu0
  %v1891 = vadd.f32 %v1878, %v1890
  %v1892 = vpop.f32.mrf.mxu0
  %1893 = vdwg.mxu0
  %1894 = vmatpush.bf16.msra.mxu0 %v1664
  %1895 = vmatpush.bf16.msra.mxu0 %v1661
  %1896 = vmatpush.bf16.msra.mxu0 %v1658
  %1897 = vmatpush.bf16.msra.mxu0 %v1655
  %1898 = vmatpush.bf16.msra.mxu0 %v1652
  %1899 = vmatpush.bf16.msra.mxu0 %v1649
  %1900 = vmatpush.bf16.msra.mxu0 %v1646
  %1901 = vmatpush.bf16.msra.mxu0 %v1643
  %1902 = vmatmul.bf16.gmra.mxu0 %v1191
  %v1903 = vpop.f32.mrf.mxu0
  %v1904 = vadd.f32 %v1891, %v1903
  %v1905 = vpop.f32.mrf.mxu0
  %1906 = vdwg.mxu0
  %1907 = vmatpush.bf16.msra.mxu0 0
  %1908 = vmatpush.bf16.msra.mxu0 0
  %1909 = vmatpush.bf16.msra.mxu0 0
  %1910 = vmatpush.bf16.msra.mxu0 0
  %1911 = vmatpush.bf16.msra.mxu0 %v1676
  %1912 = vmatpush.bf16.msra.mxu0 %v1673
  %1913 = vmatpush.bf16.msra.mxu0 %v1670
  %1914 = vmatpush.bf16.msra.mxu0 %v1667
  %1915 = vmatmul.bf16.gmra.mxu0 %v1762
  %v1916 = vpop.f32.mrf.mxu0
  %v1917 = vadd.f32 %v1904, %v1916
  %v1918 = vpop.f32.mrf.mxu0
  %1919 = vdwg.mxu0
  %v1920 = vmax.f32 %v1813, 0.0
  %v1921 = vmax.f32 %v1865, 0.0
  %v1922 = vmax.f32 %v1917, 0.0
  %v1923 = vpack.c.bf16 %v1920, %v1920
  %v1924 = vpack.c.bf16 %v1921, %v1921
  %v1925 = vpack.c.bf16 %v1922, %v1922
  %v1926 = vld [vmem:[%s4] sm:$0xff]
  %v1927 = vld [vmem:[%s4 + $0x8] sm:$0xff]
  %v1928 = vld [vmem:[%s4 + $0x10] sm:$0xff]
  %v1929 = vld [vmem:[%s4 + $0x18] sm:$0xff]
  %v1930 = vld [vmem:[%s4 + $0x20] sm:$0xff]
  %v1931 = vld [vmem:[%s4 + $0x28] sm:$0xff]
  %v1932 = vld [vmem:[%s4 + $0x30] sm:$0xff]
  %v1933 = vld [vmem:[%s4 + $0x38] sm:$0xff]
  %v1934 = vld [vmem:[%s4 + $0x40] sm:$0xff]
  %v1935 = vld [vmem:[%s4 + $0x48] sm:$0xff]
  %v1936 = vld [vmem:[%s4 + $0x50] sm:$0xff]
  %v1937 = vld [vmem:[%s4 + $0x58] sm:$0xff]
  %v1938 = vld [vmem:[%s4 + $0x60] sm:$0xff]
  %v1939 = vld [vmem:[%s4 + $0x68] sm:$0xff]
  %v1940 = vld [vmem:[%s4 + $0x70] sm:$0xff]
  %v1941 = vld [vmem:[%s4 + $0x78] sm:$0xff]
  %v1942 = vld [vmem:[%s4 + $0x80] sm:$0xff]
  %v1943 = vld [vmem:[%s4 + $0x88] sm:$0xff]
  %v1944 = vld [vmem:[%s4 + $0x90] sm:$0xff]
  %v1945 = vld [vmem:[%s4 + $0x98] sm:$0xff]
  %v1946 = vld [vmem:[%s4 + $0xa0] sm:$0xff]
  %v1947 = vld [vmem:[%s4 + $0xa8] sm:$0xff]
  %v1948 = vld [vmem:[%s4 + $0xb0] sm:$0xff]
  %v1949 = vld [vmem:[%s4 + $0xb8] sm:$0xff]
  %v1950 = vld [vmem:[%s4 + $0xc0] sm:$0xff]
  %v1951 = vld [vmem:[%s4 + $0xc8] sm:$0xff]
  %v1952 = vld [vmem:[%s4 + $0xd0] sm:$0xff]
  %v1953 = vld [vmem:[%s4 + $0xd8] sm:$0xff]
  %v1954 = vld [vmem:[%s4 + $0xe0] sm:$0xff]
  %v1955 = vld [vmem:[%s4 + $0xe8] sm:$0xff]
  %v1956 = vld [vmem:[%s4 + $0xf0] sm:$0xff]
  %v1957 = vld [vmem:[%s4 + $0xf8] sm:$0xff]
  %v1958 = vld [vmem:[%s4 + $0x100] sm:$0xff]
  %v1959 = vld [vmem:[%s4 + $0x108] sm:$0xff]
  %v1960 = vld [vmem:[%s4 + $0x110] sm:$0xff]
  %v1961 = vld [vmem:[%s4 + $0x118] sm:$0xff]
  %v1962 = vld [vmem:[%s4 + $0x120] sm:$0xff]
  %v1963 = vld [vmem:[%s4 + $0x128] sm:$0xff]
  %v1964 = vld [vmem:[%s4 + $0x130] sm:$0xff]
  %v1965 = vld [vmem:[%s4 + $0x138] sm:$0xff]
  %v1966 = vld [vmem:[%s4 + $0x140] sm:$0xff]
  %v1967 = vld [vmem:[%s4 + $0x148] sm:$0xff]
  %v1968 = vld [vmem:[%s4 + $0x150] sm:$0xff]
  %v1969 = vld [vmem:[%s4 + $0x158] sm:$0xff]
  %v1970 = vld [vmem:[%s4 + $0x160] sm:$0xff]
  %v1971 = vld [vmem:[%s4 + $0x168] sm:$0xff]
  %v1972 = vld [vmem:[%s4 + $0x170] sm:$0xff]
  %v1973 = vld [vmem:[%s4 + $0x178] sm:$0xff]
  %v1974 = vld [vmem:[%s4 + $0x180] sm:$0xff]
  %v1975 = vld [vmem:[%s4 + $0x188] sm:$0xff]
  %v1976 = vld [vmem:[%s4 + $0x190] sm:$0xff]
  %v1977 = vld [vmem:[%s4 + $0x198] sm:$0xff]
  %v1978 = vld [vmem:[%s4 + $0x1a0] sm:$0xff]
  %v1979 = vld [vmem:[%s4 + $0x1a8] sm:$0xff]
  %v1980 = vld [vmem:[%s4 + $0x1b0] sm:$0xff]
  %v1981 = vld [vmem:[%s4 + $0x1b8] sm:$0xff]
  %v1982 = vld [vmem:[%s4 + $0x1c0] sm:$0xff]
  %v1983 = vld [vmem:[%s4 + $0x1c8] sm:$0xff]
  %v1984 = vld [vmem:[%s4 + $0x1d0] sm:$0xff]
  %v1985 = vld [vmem:[%s4 + $0x1d8] sm:$0xff]
  %v1986 = vld [vmem:[%s4 + $0x1e0] sm:$0xff]
  %v1987 = vld [vmem:[%s4 + $0x1e8] sm:$0xff]
  %v1988 = vld [vmem:[%s4 + $0x1f0] sm:$0xff]
  %v1989 = vld [vmem:[%s4 + $0x1f8] sm:$0xff]
  %v1990 = vld [vmem:[%s4 + $0x200] sm:$0xff]
  %v1991 = vld [vmem:[%s4 + $0x208] sm:$0xff]
  %v1992 = vld [vmem:[%s4 + $0x210] sm:$0xff]
  %v1993 = vld [vmem:[%s4 + $0x218] sm:$0xff]
  %v1994 = vld [vmem:[%s4 + $0x220] sm:$0xff]
  %v1995 = vld [vmem:[%s4 + $0x228] sm:$0xff]
  %v1996 = vld [vmem:[%s4 + $0x230] sm:$0xff]
  %v1997 = vld [vmem:[%s4 + $0x238] sm:$0xff]
  %v1998 = vld [vmem:[%s4 + $0x240] sm:$0xff]
  %v1999 = vld [vmem:[%s4 + $0x248] sm:$0xff]
  %v2000 = vld [vmem:[%s4 + $0x250] sm:$0xff]
  %v2001 = vld [vmem:[%s4 + $0x258] sm:$0xff]
  %v2002 = vld [vmem:[%s4 + $0x260] sm:$0xff]
  %v2003 = vld [vmem:[%s4 + $0x268] sm:$0xff]
  %v2004 = vld [vmem:[%s4 + $0x270] sm:$0xff]
  %v2005 = vld [vmem:[%s4 + $0x278] sm:$0xff]
  %v2006 = vld [vmem:[%s6 + $0xb] sm:$0xf]
  %v2008 = vperm.slane %v2006, 0
  %v2009 = vperm.slane %v2006, 1
  %v2010 = vperm.slane %v2006, 2
  %v2011 = vperm.slane %v2006, 3
  %v2096 = vunpack.c.l.b16 %v1926
  %v2097 = vunpack.c.h.b16 %v1926
  %v2098 = vunpack.c.l.b16 %v1927
  %v2099 = vunpack.c.h.b16 %v1927
  %v2100 = vunpack.c.l.b16 %v1928
  %v2101 = vunpack.c.h.b16 %v1928
  %v2102 = vunpack.c.l.b16 %v1929
  %v2103 = vunpack.c.h.b16 %v1929
  %v2104 = vunpack.c.l.b16 %v1930
  %v2105 = vunpack.c.h.b16 %v1930
  %v2106 = vunpack.c.l.b16 %v1931
  %v2107 = vunpack.c.h.b16 %v1931
  %v2108 = vunpack.c.l.b16 %v1932
  %v2109 = vunpack.c.h.b16 %v1932
  %v2110 = vunpack.c.l.b16 %v1933
  %v2111 = vunpack.c.h.b16 %v1933
  %v2112 = vunpack.c.l.b16 %v1934
  %v2113 = vunpack.c.h.b16 %v1934
  %v2114 = vunpack.c.l.b16 %v1935
  %v2115 = vunpack.c.h.b16 %v1935
  %v2116 = vunpack.c.l.b16 %v1936
  %v2117 = vunpack.c.h.b16 %v1936
  %v2118 = vunpack.c.l.b16 %v1937
  %v2119 = vunpack.c.h.b16 %v1937
  %v2120 = vunpack.c.l.b16 %v1938
  %v2121 = vunpack.c.h.b16 %v1938
  %v2122 = vunpack.c.l.b16 %v1939
  %v2123 = vunpack.c.h.b16 %v1939
  %v2124 = vunpack.c.l.b16 %v1940
  %v2125 = vunpack.c.h.b16 %v1940
  %v2126 = vunpack.c.l.b16 %v1941
  %v2127 = vunpack.c.h.b16 %v1941
  %v2128 = vunpack.c.l.b16 %v1942
  %v2129 = vunpack.c.h.b16 %v1942
  %v2130 = vunpack.c.l.b16 %v1943
  %v2131 = vunpack.c.h.b16 %v1943
  %v2132 = vunpack.c.l.b16 %v1944
  %v2133 = vunpack.c.h.b16 %v1944
  %v2134 = vunpack.c.l.b16 %v1945
  %v2135 = vunpack.c.h.b16 %v1945
  %v2136 = vunpack.c.l.b16 %v1946
  %v2137 = vunpack.c.h.b16 %v1946
  %v2138 = vunpack.c.l.b16 %v1947
  %v2139 = vunpack.c.h.b16 %v1947
  %v2140 = vunpack.c.l.b16 %v1948
  %v2141 = vunpack.c.h.b16 %v1948
  %v2142 = vunpack.c.l.b16 %v1949
  %v2143 = vunpack.c.h.b16 %v1949
  %v2144 = vunpack.c.l.b16 %v1950
  %v2145 = vunpack.c.h.b16 %v1950
  %v2146 = vunpack.c.l.b16 %v1951
  %v2147 = vunpack.c.h.b16 %v1951
  %v2148 = vunpack.c.l.b16 %v1952
  %v2149 = vunpack.c.h.b16 %v1952
  %v2150 = vunpack.c.l.b16 %v1953
  %v2151 = vunpack.c.h.b16 %v1953
  %v2152 = vunpack.c.l.b16 %v1954
  %v2153 = vunpack.c.h.b16 %v1954
  %v2154 = vunpack.c.l.b16 %v1955
  %v2155 = vunpack.c.h.b16 %v1955
  %v2156 = vunpack.c.l.b16 %v1956
  %v2157 = vunpack.c.h.b16 %v1956
  %v2158 = vunpack.c.l.b16 %v1957
  %v2159 = vunpack.c.h.b16 %v1957
  %v2160 = vunpack.c.l.b16 %v1958
  %v2161 = vunpack.c.h.b16 %v1958
  %v2162 = vunpack.c.l.b16 %v1959
  %v2163 = vunpack.c.h.b16 %v1959
  %v2164 = vunpack.c.l.b16 %v1960
  %v2165 = vunpack.c.h.b16 %v1960
  %v2166 = vunpack.c.l.b16 %v1961
  %v2167 = vunpack.c.h.b16 %v1961
  %v2168 = vunpack.c.l.b16 %v1962
  %v2169 = vunpack.c.h.b16 %v1962
  %v2170 = vunpack.c.l.b16 %v1963
  %v2171 = vunpack.c.h.b16 %v1963
  %v2172 = vunpack.c.l.b16 %v1964
  %v2173 = vunpack.c.h.b16 %v1964
  %v2174 = vunpack.c.l.b16 %v1965
  %v2175 = vunpack.c.h.b16 %v1965
  %v2176 = vunpack.c.l.b16 %v1966
  %v2177 = vunpack.c.h.b16 %v1966
  %v2178 = vunpack.c.l.b16 %v1967
  %v2179 = vunpack.c.h.b16 %v1967
  %v2180 = vunpack.c.l.b16 %v1968
  %v2181 = vunpack.c.h.b16 %v1968
  %v2182 = vunpack.c.l.b16 %v1969
  %v2183 = vunpack.c.h.b16 %v1969
  %v2184 = vunpack.c.l.b16 %v1970
  %v2185 = vunpack.c.h.b16 %v1970
  %v2186 = vunpack.c.l.b16 %v1971
  %v2187 = vunpack.c.h.b16 %v1971
  %v2188 = vunpack.c.l.b16 %v1972
  %v2189 = vunpack.c.h.b16 %v1972
  %v2190 = vunpack.c.l.b16 %v1973
  %v2191 = vunpack.c.h.b16 %v1973
  %v2192 = vunpack.c.l.b16 %v1974
  %v2193 = vunpack.c.h.b16 %v1974
  %v2194 = vunpack.c.l.b16 %v1975
  %v2195 = vunpack.c.h.b16 %v1975
  %v2196 = vunpack.c.l.b16 %v1976
  %v2197 = vunpack.c.h.b16 %v1976
  %v2198 = vunpack.c.l.b16 %v1977
  %v2199 = vunpack.c.h.b16 %v1977
  %v2200 = vunpack.c.l.b16 %v1978
  %v2201 = vunpack.c.h.b16 %v1978
  %v2202 = vunpack.c.l.b16 %v1979
  %v2203 = vunpack.c.h.b16 %v1979
  %v2204 = vunpack.c.l.b16 %v1980
  %v2205 = vunpack.c.h.b16 %v1980
  %v2206 = vunpack.c.l.b16 %v1981
  %v2207 = vunpack.c.h.b16 %v1981
  %v2208 = vunpack.c.l.b16 %v1982
  %v2209 = vunpack.c.h.b16 %v1982
  %v2210 = vunpack.c.l.b16 %v1983
  %v2211 = vunpack.c.h.b16 %v1983
  %v2212 = vunpack.c.l.b16 %v1984
  %v2213 = vunpack.c.h.b16 %v1984
  %v2214 = vunpack.c.l.b16 %v1985
  %v2215 = vunpack.c.h.b16 %v1985
  %v2216 = vunpack.c.l.b16 %v1986
  %v2217 = vunpack.c.h.b16 %v1986
  %v2218 = vunpack.c.l.b16 %v1987
  %v2219 = vunpack.c.h.b16 %v1987
  %v2220 = vunpack.c.l.b16 %v1988
  %v2221 = vunpack.c.h.b16 %v1988
  %v2222 = vunpack.c.l.b16 %v1989
  %v2223 = vunpack.c.h.b16 %v1989
  %v2224 = vunpack.c.l.b16 %v1990
  %v2225 = vunpack.c.h.b16 %v1990
  %v2226 = vunpack.c.l.b16 %v1991
  %v2227 = vunpack.c.h.b16 %v1991
  %v2228 = vunpack.c.l.b16 %v1992
  %v2229 = vunpack.c.h.b16 %v1992
  %v2230 = vunpack.c.l.b16 %v1993
  %v2231 = vunpack.c.h.b16 %v1993
  %v2232 = vunpack.c.l.b16 %v1994
  %v2233 = vunpack.c.h.b16 %v1994
  %v2234 = vunpack.c.l.b16 %v1995
  %v2235 = vunpack.c.h.b16 %v1995
  %v2236 = vunpack.c.l.b16 %v1996
  %v2237 = vunpack.c.h.b16 %v1996
  %v2238 = vunpack.c.l.b16 %v1997
  %v2239 = vunpack.c.h.b16 %v1997
  %v2240 = vunpack.c.l.b16 %v1998
  %v2241 = vunpack.c.h.b16 %v1998
  %v2242 = vunpack.c.l.b16 %v1999
  %v2243 = vunpack.c.h.b16 %v1999
  %v2244 = vunpack.c.l.b16 %v2000
  %v2245 = vunpack.c.h.b16 %v2000
  %v2246 = vunpack.c.l.b16 %v2001
  %v2247 = vunpack.c.h.b16 %v2001
  %v2248 = vunpack.c.l.b16 %v2002
  %v2249 = vunpack.c.h.b16 %v2002
  %v2250 = vunpack.c.l.b16 %v2003
  %v2251 = vunpack.c.h.b16 %v2003
  %v2252 = vunpack.c.l.b16 %v2004
  %v2253 = vunpack.c.h.b16 %v2004
  %v2254 = vunpack.c.l.b16 %v2005
  %v2255 = vunpack.c.h.b16 %v2005
  %v2256 = vpack.c.b16 %v2100, %v2096
  %v2257 = vpack.c.b16 %v2101, %v2097
  %v2258 = vpack.c.b16 %v2102, %v2098
  %v2259 = vpack.c.b16 %v2103, %v2099
  %v2260 = vpack.c.b16 %v2108, %v2104
  %v2261 = vpack.c.b16 %v2109, %v2105
  %v2262 = vpack.c.b16 %v2110, %v2106
  %v2263 = vpack.c.b16 %v2111, %v2107
  %v2264 = vpack.c.b16 %v2116, %v2112
  %v2265 = vpack.c.b16 %v2117, %v2113
  %v2266 = vpack.c.b16 %v2118, %v2114
  %v2267 = vpack.c.b16 %v2119, %v2115
  %v2268 = vpack.c.b16 %v2124, %v2120
  %v2269 = vpack.c.b16 %v2125, %v2121
  %v2270 = vpack.c.b16 %v2126, %v2122
  %v2271 = vpack.c.b16 %v2127, %v2123
  %v2272 = vpack.c.b16 %v2132, %v2128
  %v2273 = vpack.c.b16 %v2133, %v2129
  %v2274 = vpack.c.b16 %v2134, %v2130
  %v2275 = vpack.c.b16 %v2135, %v2131
  %v2276 = vpack.c.b16 %v2140, %v2136
  %v2277 = vpack.c.b16 %v2141, %v2137
  %v2278 = vpack.c.b16 %v2142, %v2138
  %v2279 = vpack.c.b16 %v2143, %v2139
  %v2280 = vpack.c.b16 %v2148, %v2144
  %v2281 = vpack.c.b16 %v2149, %v2145
  %v2282 = vpack.c.b16 %v2150, %v2146
  %v2283 = vpack.c.b16 %v2151, %v2147
  %v2284 = vpack.c.b16 %v2156, %v2152
  %v2285 = vpack.c.b16 %v2157, %v2153
  %v2286 = vpack.c.b16 %v2158, %v2154
  %v2287 = vpack.c.b16 %v2159, %v2155
  %v2288 = vpack.c.b16 %v2164, %v2160
  %v2289 = vpack.c.b16 %v2165, %v2161
  %v2290 = vpack.c.b16 %v2166, %v2162
  %v2291 = vpack.c.b16 %v2167, %v2163
  %v2292 = vpack.c.b16 %v2172, %v2168
  %v2293 = vpack.c.b16 %v2173, %v2169
  %v2294 = vpack.c.b16 %v2174, %v2170
  %v2295 = vpack.c.b16 %v2175, %v2171
  %v2296 = vpack.c.b16 %v2180, %v2176
  %v2297 = vpack.c.b16 %v2181, %v2177
  %v2298 = vpack.c.b16 %v2182, %v2178
  %v2299 = vpack.c.b16 %v2183, %v2179
  %v2300 = vpack.c.b16 %v2188, %v2184
  %v2301 = vpack.c.b16 %v2189, %v2185
  %v2302 = vpack.c.b16 %v2190, %v2186
  %v2303 = vpack.c.b16 %v2191, %v2187
  %v2304 = vpack.c.b16 %v2196, %v2192
  %v2305 = vpack.c.b16 %v2197, %v2193
  %v2306 = vpack.c.b16 %v2198, %v2194
  %v2307 = vpack.c.b16 %v2199, %v2195
  %v2308 = vpack.c.b16 %v2204, %v2200
  %v2309 = vpack.c.b16 %v2205, %v2201
  %v2310 = vpack.c.b16 %v2206, %v2202
  %v2311 = vpack.c.b16 %v2207, %v2203
  %v2312 = vpack.c.b16 %v2212, %v2208
  %v2313 = vpack.c.b16 %v2213, %v2209
  %v2314 = vpack.c.b16 %v2214, %v2210
  %v2315 = vpack.c.b16 %v2215, %v2211
  %v2316 = vpack.c.b16 %v2220, %v2216
  %v2317 = vpack.c.b16 %v2221, %v2217
  %v2318 = vpack.c.b16 %v2222, %v2218
  %v2319 = vpack.c.b16 %v2223, %v2219
  %v2320 = vpack.c.b16 %v2228, %v2224
  %v2321 = vpack.c.b16 %v2229, %v2225
  %v2322 = vpack.c.b16 %v2230, %v2226
  %v2323 = vpack.c.b16 %v2231, %v2227
  %v2324 = vpack.c.b16 %v2236, %v2232
  %v2325 = vpack.c.b16 %v2237, %v2233
  %v2326 = vpack.c.b16 %v2238, %v2234
  %v2327 = vpack.c.b16 %v2239, %v2235
  %v2328 = vpack.c.b16 %v2244, %v2240
  %v2329 = vpack.c.b16 %v2245, %v2241
  %v2330 = vpack.c.b16 %v2246, %v2242
  %v2331 = vpack.c.b16 %v2247, %v2243
  %v2332 = vpack.c.b16 %v2252, %v2248
  %v2333 = vpack.c.b16 %v2253, %v2249
  %v2334 = vpack.c.b16 %v2254, %v2250
  %v2335 = vpack.c.b16 %v2255, %v2251
  %v2417 = vsel %vm135, %v1925, 0
  %2419 = vmatpush.bf16.msra.mxu0 %v2284
  %2420 = vmatpush.bf16.msra.mxu0 %v2280
  %2421 = vmatpush.bf16.msra.mxu0 %v2276
  %2422 = vmatpush.bf16.msra.mxu0 %v2272
  %2423 = vmatpush.bf16.msra.mxu0 %v2268
  %2424 = vmatpush.bf16.msra.mxu0 %v2264
  %2425 = vmatpush.bf16.msra.mxu0 %v2260
  %2426 = vmatpush.bf16.msra.mxu0 %v2256
  %2427 = vmatmul.bf16.gmra.mxu0 %v1923
  %v2428 = vpop.f32.mrf.mxu0
  %v2429 = vadd.f32 %v2008, %v2428
  %v2430 = vpop.f32.mrf.mxu0
  %2431 = vdwg.mxu0
  %2432 = vmatpush.bf16.msra.mxu0 %v2316
  %2433 = vmatpush.bf16.msra.mxu0 %v2312
  %2434 = vmatpush.bf16.msra.mxu0 %v2308
  %2435 = vmatpush.bf16.msra.mxu0 %v2304
  %2436 = vmatpush.bf16.msra.mxu0 %v2300
  %2437 = vmatpush.bf16.msra.mxu0 %v2296
  %2438 = vmatpush.bf16.msra.mxu0 %v2292
  %2439 = vmatpush.bf16.msra.mxu0 %v2288
  %2440 = vmatmul.bf16.gmra.mxu0 %v1924
  %v2441 = vpop.f32.mrf.mxu0
  %v2442 = vadd.f32 %v2429, %v2441
  %v2443 = vpop.f32.mrf.mxu0
  %2444 = vdwg.mxu0
  %2445 = vmatpush.bf16.msra.mxu0 0
  %2446 = vmatpush.bf16.msra.mxu0 0
  %2447 = vmatpush.bf16.msra.mxu0 0
  %2448 = vmatpush.bf16.msra.mxu0 0
  %2449 = vmatpush.bf16.msra.mxu0 %v2332
  %2450 = vmatpush.bf16.msra.mxu0 %v2328
  %2451 = vmatpush.bf16.msra.mxu0 %v2324
  %2452 = vmatpush.bf16.msra.mxu0 %v2320
  %2453 = vmatmul.bf16.gmra.mxu0 %v2417
  %v2454 = vpop.f32.mrf.mxu0
  %v2455 = vadd.f32 %v2442, %v2454
  %v2456 = vpop.f32.mrf.mxu0
  %2457 = vdwg.mxu0
  %2458 = vmatpush.bf16.msra.mxu0 %v2285
  %2459 = vmatpush.bf16.msra.mxu0 %v2281
  %2460 = vmatpush.bf16.msra.mxu0 %v2277
  %2461 = vmatpush.bf16.msra.mxu0 %v2273
  %2462 = vmatpush.bf16.msra.mxu0 %v2269
  %2463 = vmatpush.bf16.msra.mxu0 %v2265
  %2464 = vmatpush.bf16.msra.mxu0 %v2261
  %2465 = vmatpush.bf16.msra.mxu0 %v2257
  %2466 = vmatmul.bf16.gmra.mxu0 %v1923
  %v2467 = vpop.f32.mrf.mxu0
  %v2468 = vadd.f32 %v2009, %v2467
  %v2469 = vpop.f32.mrf.mxu0
  %2470 = vdwg.mxu0
  %2471 = vmatpush.bf16.msra.mxu0 %v2317
  %2472 = vmatpush.bf16.msra.mxu0 %v2313
  %2473 = vmatpush.bf16.msra.mxu0 %v2309
  %2474 = vmatpush.bf16.msra.mxu0 %v2305
  %2475 = vmatpush.bf16.msra.mxu0 %v2301
  %2476 = vmatpush.bf16.msra.mxu0 %v2297
  %2477 = vmatpush.bf16.msra.mxu0 %v2293
  %2478 = vmatpush.bf16.msra.mxu0 %v2289
  %2479 = vmatmul.bf16.gmra.mxu0 %v1924
  %v2480 = vpop.f32.mrf.mxu0
  %v2481 = vadd.f32 %v2468, %v2480
  %v2482 = vpop.f32.mrf.mxu0
  %2483 = vdwg.mxu0
  %2484 = vmatpush.bf16.msra.mxu0 0
  %2485 = vmatpush.bf16.msra.mxu0 0
  %2486 = vmatpush.bf16.msra.mxu0 0
  %2487 = vmatpush.bf16.msra.mxu0 0
  %2488 = vmatpush.bf16.msra.mxu0 %v2333
  %2489 = vmatpush.bf16.msra.mxu0 %v2329
  %2490 = vmatpush.bf16.msra.mxu0 %v2325
  %2491 = vmatpush.bf16.msra.mxu0 %v2321
  %2492 = vmatmul.bf16.gmra.mxu0 %v2417
  %v2493 = vpop.f32.mrf.mxu0
  %v2494 = vadd.f32 %v2481, %v2493
  %v2495 = vpop.f32.mrf.mxu0
  %2496 = vdwg.mxu0
  %2497 = vmatpush.bf16.msra.mxu0 %v2286
  %2498 = vmatpush.bf16.msra.mxu0 %v2282
  %2499 = vmatpush.bf16.msra.mxu0 %v2278
  %2500 = vmatpush.bf16.msra.mxu0 %v2274
  %2501 = vmatpush.bf16.msra.mxu0 %v2270
  %2502 = vmatpush.bf16.msra.mxu0 %v2266
  %2503 = vmatpush.bf16.msra.mxu0 %v2262
  %2504 = vmatpush.bf16.msra.mxu0 %v2258
  %2505 = vmatmul.bf16.gmra.mxu0 %v1923
  %v2506 = vpop.f32.mrf.mxu0
  %v2507 = vadd.f32 %v2010, %v2506
  %v2508 = vpop.f32.mrf.mxu0
  %2509 = vdwg.mxu0
  %2510 = vmatpush.bf16.msra.mxu0 %v2318
  %2511 = vmatpush.bf16.msra.mxu0 %v2314
  %2512 = vmatpush.bf16.msra.mxu0 %v2310
  %2513 = vmatpush.bf16.msra.mxu0 %v2306
  %2514 = vmatpush.bf16.msra.mxu0 %v2302
  %2515 = vmatpush.bf16.msra.mxu0 %v2298
  %2516 = vmatpush.bf16.msra.mxu0 %v2294
  %2517 = vmatpush.bf16.msra.mxu0 %v2290
  %2518 = vmatmul.bf16.gmra.mxu0 %v1924
  %v2519 = vpop.f32.mrf.mxu0
  %v2520 = vadd.f32 %v2507, %v2519
  %v2521 = vpop.f32.mrf.mxu0
  %2522 = vdwg.mxu0
  %2523 = vmatpush.bf16.msra.mxu0 0
  %2524 = vmatpush.bf16.msra.mxu0 0
  %2525 = vmatpush.bf16.msra.mxu0 0
  %2526 = vmatpush.bf16.msra.mxu0 0
  %2527 = vmatpush.bf16.msra.mxu0 %v2334
  %2528 = vmatpush.bf16.msra.mxu0 %v2330
  %2529 = vmatpush.bf16.msra.mxu0 %v2326
  %2530 = vmatpush.bf16.msra.mxu0 %v2322
  %2531 = vmatmul.bf16.gmra.mxu0 %v2417
  %v2532 = vpop.f32.mrf.mxu0
  %v2533 = vadd.f32 %v2520, %v2532
  %v2534 = vpop.f32.mrf.mxu0
  %2535 = vdwg.mxu0
  %2536 = vmatpush.bf16.msra.mxu0 %v2287
  %2537 = vmatpush.bf16.msra.mxu0 %v2283
  %2538 = vmatpush.bf16.msra.mxu0 %v2279
  %2539 = vmatpush.bf16.msra.mxu0 %v2275
  %2540 = vmatpush.bf16.msra.mxu0 %v2271
  %2541 = vmatpush.bf16.msra.mxu0 %v2267
  %2542 = vmatpush.bf16.msra.mxu0 %v2263
  %2543 = vmatpush.bf16.msra.mxu0 %v2259
  %2544 = vmatmul.bf16.gmra.mxu0 %v1923
  %v2545 = vpop.f32.mrf.mxu0
  %v2546 = vadd.f32 %v2011, %v2545
  %v2547 = vpop.f32.mrf.mxu0
  %2548 = vdwg.mxu0
  %2549 = vmatpush.bf16.msra.mxu0 %v2319
  %2550 = vmatpush.bf16.msra.mxu0 %v2315
  %2551 = vmatpush.bf16.msra.mxu0 %v2311
  %2552 = vmatpush.bf16.msra.mxu0 %v2307
  %2553 = vmatpush.bf16.msra.mxu0 %v2303
  %2554 = vmatpush.bf16.msra.mxu0 %v2299
  %2555 = vmatpush.bf16.msra.mxu0 %v2295
  %2556 = vmatpush.bf16.msra.mxu0 %v2291
  %2557 = vmatmul.bf16.gmra.mxu0 %v1924
  %v2558 = vpop.f32.mrf.mxu0
  %v2559 = vadd.f32 %v2546, %v2558
  %v2560 = vpop.f32.mrf.mxu0
  %2561 = vdwg.mxu0
  %2562 = vmatpush.bf16.msra.mxu0 0
  %2563 = vmatpush.bf16.msra.mxu0 0
  %2564 = vmatpush.bf16.msra.mxu0 0
  %2565 = vmatpush.bf16.msra.mxu0 0
  %2566 = vmatpush.bf16.msra.mxu0 %v2335
  %2567 = vmatpush.bf16.msra.mxu0 %v2331
  %2568 = vmatpush.bf16.msra.mxu0 %v2327
  %2569 = vmatpush.bf16.msra.mxu0 %v2323
  %2570 = vmatmul.bf16.gmra.mxu0 %v2417
  %v2571 = vpop.f32.mrf.mxu0
  %v2572 = vadd.f32 %v2559, %v2571
  %v2573 = vpop.f32.mrf.mxu0
  %2574 = vdwg.mxu0
  %v2575 = vmax.f32 %v2455, 0.0
  %v2576 = vmax.f32 %v2494, 0.0
  %v2577 = vmax.f32 %v2533, 0.0
  %v2578 = vmax.f32 %v2572, 0.0
  %v2579 = vpack.c.bf16 %v2575, %v2575
  %v2580 = vpack.c.bf16 %v2576, %v2576
  %v2581 = vpack.c.bf16 %v2577, %v2577
  %v2582 = vpack.c.bf16 %v2578, %v2578
  %v2583 = vld [vmem:[%s5] sm:$0xf]
  %v2584 = vld [vmem:[%s5 + $0x4] sm:$0xf]
  %v2585 = vld [vmem:[%s5 + $0x8] sm:$0xf]
  %v2586 = vld [vmem:[%s5 + $0xc] sm:$0xf]
  %v2587 = vld [vmem:[%s5 + $0x10] sm:$0xf]
  %v2588 = vld [vmem:[%s5 + $0x14] sm:$0xf]
  %v2589 = vld [vmem:[%s5 + $0x18] sm:$0xf]
  %v2590 = vld [vmem:[%s5 + $0x1c] sm:$0xf]
  %v2591 = vld [vmem:[%s5 + $0x20] sm:$0xf]
  %v2592 = vld [vmem:[%s5 + $0x24] sm:$0xf]
  %v2593 = vld [vmem:[%s5 + $0x28] sm:$0xf]
  %v2594 = vld [vmem:[%s5 + $0x2c] sm:$0xf]
  %v2595 = vld [vmem:[%s5 + $0x30] sm:$0xf]
  %v2596 = vld [vmem:[%s5 + $0x34] sm:$0xf]
  %v2597 = vld [vmem:[%s5 + $0x38] sm:$0xf]
  %v2598 = vld [vmem:[%s5 + $0x3c] sm:$0xf]
  %v2599 = vld [vmem:[%s5 + $0x40] sm:$0xf]
  %v2600 = vld [vmem:[%s5 + $0x44] sm:$0xf]
  %v2601 = vld [vmem:[%s5 + $0x48] sm:$0xf]
  %v2602 = vld [vmem:[%s5 + $0x4c] sm:$0xf]
  %v2603 = vld [vmem:[%s5 + $0x50] sm:$0xf]
  %v2604 = vld [vmem:[%s5 + $0x54] sm:$0xf]
  %v2605 = vld [vmem:[%s5 + $0x58] sm:$0xf]
  %v2606 = vld [vmem:[%s5 + $0x5c] sm:$0xf]
  %v2607 = vld [vmem:[%s5 + $0x60] sm:$0xf]
  %v2608 = vld [vmem:[%s5 + $0x64] sm:$0xf]
  %v2609 = vld [vmem:[%s5 + $0x68] sm:$0xf]
  %v2610 = vld [vmem:[%s5 + $0x6c] sm:$0xf]
  %v2611 = vld [vmem:[%s5 + $0x70] sm:$0xf]
  %v2612 = vld [vmem:[%s5 + $0x74] sm:$0xf]
  %v2613 = vld [vmem:[%s5 + $0x78] sm:$0xf]
  %v2614 = vld [vmem:[%s5 + $0x7c] sm:$0xf]
  %v2615 = vld [vmem:[%s5 + $0x80] sm:$0xf]
  %v2616 = vld [vmem:[%s5 + $0x84] sm:$0xf]
  %v2617 = vld [vmem:[%s5 + $0x88] sm:$0xf]
  %v2618 = vld [vmem:[%s5 + $0x8c] sm:$0xf]
  %v2619 = vld [vmem:[%s5 + $0x90] sm:$0xf]
  %v2620 = vld [vmem:[%s5 + $0x94] sm:$0xf]
  %v2621 = vld [vmem:[%s5 + $0x98] sm:$0xf]
  %v2622 = vld [vmem:[%s5 + $0x9c] sm:$0xf]
  %v2623 = vld [vmem:[%s5 + $0xa0] sm:$0xf]
  %v2624 = vld [vmem:[%s5 + $0xa4] sm:$0xf]
  %v2625 = vld [vmem:[%s5 + $0xa8] sm:$0xf]
  %v2626 = vld [vmem:[%s5 + $0xac] sm:$0xf]
  %v2627 = vld [vmem:[%s5 + $0xb0] sm:$0xf]
  %v2628 = vld [vmem:[%s5 + $0xb4] sm:$0xf]
  %v2629 = vld [vmem:[%s5 + $0xb8] sm:$0xf]
  %v2630 = vld [vmem:[%s5 + $0xbc] sm:$0xf]
  %v2631 = vld [vmem:[%s5 + $0xc0] sm:$0xf]
  %v2632 = vld [vmem:[%s5 + $0xc4] sm:$0xf]
  %v2633 = vld [vmem:[%s5 + $0xc8] sm:$0xf]
  %v2634 = vld [vmem:[%s5 + $0xcc] sm:$0xf]
  %v2635 = vld [vmem:[%s5 + $0xd0] sm:$0xf]
  %v2636 = vld [vmem:[%s5 + $0xd4] sm:$0xf]
  %v2637 = vld [vmem:[%s5 + $0xd8] sm:$0xf]
  %v2638 = vld [vmem:[%s5 + $0xdc] sm:$0xf]
  %v2639 = vld [vmem:[%s5 + $0xe0] sm:$0xf]
  %v2640 = vld [vmem:[%s5 + $0xe4] sm:$0xf]
  %v2641 = vld [vmem:[%s5 + $0xe8] sm:$0xf]
  %v2642 = vld [vmem:[%s5 + $0xec] sm:$0xf]
  %v2643 = vld [vmem:[%s5 + $0xf0] sm:$0xf]
  %v2644 = vld [vmem:[%s5 + $0xf4] sm:$0xf]
  %v2645 = vld [vmem:[%s5 + $0xf8] sm:$0xf]
  %v2646 = vld [vmem:[%s5 + $0xfc] sm:$0xf]
  %v2647 = vld [vmem:[%s6 + $0xf] sm:$0x1]
  %v2649 = vperm.slane %v2647, 0
  %v2715 = vunpack.c.l.b16 %v2583
  %v2716 = vunpack.c.l.b16 %v2584
  %v2717 = vunpack.c.l.b16 %v2585
  %v2718 = vunpack.c.l.b16 %v2586
  %v2719 = vunpack.c.l.b16 %v2587
  %v2720 = vunpack.c.l.b16 %v2588
  %v2721 = vunpack.c.l.b16 %v2589
  %v2722 = vunpack.c.l.b16 %v2590
  %v2723 = vunpack.c.l.b16 %v2591
  %v2724 = vunpack.c.l.b16 %v2592
  %v2725 = vunpack.c.l.b16 %v2593
  %v2726 = vunpack.c.l.b16 %v2594
  %v2727 = vunpack.c.l.b16 %v2595
  %v2728 = vunpack.c.l.b16 %v2596
  %v2729 = vunpack.c.l.b16 %v2597
  %v2730 = vunpack.c.l.b16 %v2598
  %v2731 = vunpack.c.l.b16 %v2599
  %v2732 = vunpack.c.l.b16 %v2600
  %v2733 = vunpack.c.l.b16 %v2601
  %v2734 = vunpack.c.l.b16 %v2602
  %v2735 = vunpack.c.l.b16 %v2603
  %v2736 = vunpack.c.l.b16 %v2604
  %v2737 = vunpack.c.l.b16 %v2605
  %v2738 = vunpack.c.l.b16 %v2606
  %v2739 = vunpack.c.l.b16 %v2607
  %v2740 = vunpack.c.l.b16 %v2608
  %v2741 = vunpack.c.l.b16 %v2609
  %v2742 = vunpack.c.l.b16 %v2610
  %v2743 = vunpack.c.l.b16 %v2611
  %v2744 = vunpack.c.l.b16 %v2612
  %v2745 = vunpack.c.l.b16 %v2613
  %v2746 = vunpack.c.l.b16 %v2614
  %v2747 = vunpack.c.l.b16 %v2615
  %v2748 = vunpack.c.l.b16 %v2616
  %v2749 = vunpack.c.l.b16 %v2617
  %v2750 = vunpack.c.l.b16 %v2618
  %v2751 = vunpack.c.l.b16 %v2619
  %v2752 = vunpack.c.l.b16 %v2620
  %v2753 = vunpack.c.l.b16 %v2621
  %v2754 = vunpack.c.l.b16 %v2622
  %v2755 = vunpack.c.l.b16 %v2623
  %v2756 = vunpack.c.l.b16 %v2624
  %v2757 = vunpack.c.l.b16 %v2625
  %v2758 = vunpack.c.l.b16 %v2626
  %v2759 = vunpack.c.l.b16 %v2627
  %v2760 = vunpack.c.l.b16 %v2628
  %v2761 = vunpack.c.l.b16 %v2629
  %v2762 = vunpack.c.l.b16 %v2630
  %v2763 = vunpack.c.l.b16 %v2631
  %v2764 = vunpack.c.l.b16 %v2632
  %v2765 = vunpack.c.l.b16 %v2633
  %v2766 = vunpack.c.l.b16 %v2634
  %v2767 = vunpack.c.l.b16 %v2635
  %v2768 = vunpack.c.l.b16 %v2636
  %v2769 = vunpack.c.l.b16 %v2637
  %v2770 = vunpack.c.l.b16 %v2638
  %v2771 = vunpack.c.l.b16 %v2639
  %v2772 = vunpack.c.l.b16 %v2640
  %v2773 = vunpack.c.l.b16 %v2641
  %v2774 = vunpack.c.l.b16 %v2642
  %v2775 = vunpack.c.l.b16 %v2643
  %v2776 = vunpack.c.l.b16 %v2644
  %v2777 = vunpack.c.l.b16 %v2645
  %v2778 = vunpack.c.l.b16 %v2646
  %v2779 = vpack.c.b16 %v2716, %v2715
  %v2780 = vpack.c.b16 %v2718, %v2717
  %v2781 = vpack.c.b16 %v2720, %v2719
  %v2782 = vpack.c.b16 %v2722, %v2721
  %v2783 = vpack.c.b16 %v2724, %v2723
  %v2784 = vpack.c.b16 %v2726, %v2725
  %v2785 = vpack.c.b16 %v2728, %v2727
  %v2786 = vpack.c.b16 %v2730, %v2729
  %v2787 = vpack.c.b16 %v2732, %v2731
  %v2788 = vpack.c.b16 %v2734, %v2733
  %v2789 = vpack.c.b16 %v2736, %v2735
  %v2790 = vpack.c.b16 %v2738, %v2737
  %v2791 = vpack.c.b16 %v2740, %v2739
  %v2792 = vpack.c.b16 %v2742, %v2741
  %v2793 = vpack.c.b16 %v2744, %v2743
  %v2794 = vpack.c.b16 %v2746, %v2745
  %v2795 = vpack.c.b16 %v2748, %v2747
  %v2796 = vpack.c.b16 %v2750, %v2749
  %v2797 = vpack.c.b16 %v2752, %v2751
  %v2798 = vpack.c.b16 %v2754, %v2753
  %v2799 = vpack.c.b16 %v2756, %v2755
  %v2800 = vpack.c.b16 %v2758, %v2757
  %v2801 = vpack.c.b16 %v2760, %v2759
  %v2802 = vpack.c.b16 %v2762, %v2761
  %v2803 = vpack.c.b16 %v2764, %v2763
  %v2804 = vpack.c.b16 %v2766, %v2765
  %v2805 = vpack.c.b16 %v2768, %v2767
  %v2806 = vpack.c.b16 %v2770, %v2769
  %v2807 = vpack.c.b16 %v2772, %v2771
  %v2808 = vpack.c.b16 %v2774, %v2773
  %v2809 = vpack.c.b16 %v2776, %v2775
  %v2810 = vpack.c.b16 %v2778, %v2777
  %2843 = vmatpush.bf16.msra.mxu0 %v2786
  %2844 = vmatpush.bf16.msra.mxu0 %v2785
  %2845 = vmatpush.bf16.msra.mxu0 %v2784
  %2846 = vmatpush.bf16.msra.mxu0 %v2783
  %2847 = vmatpush.bf16.msra.mxu0 %v2782
  %2848 = vmatpush.bf16.msra.mxu0 %v2781
  %2849 = vmatpush.bf16.msra.mxu0 %v2780
  %2850 = vmatpush.bf16.msra.mxu0 %v2779
  %2851 = vmatmul.bf16.gmra.mxu0 %v2579
  %v2852 = vpop.f32.mrf.mxu0
  %v2853 = vadd.f32 %v2649, %v2852
  %v2854 = vpop.f32.mrf.mxu0
  %2855 = vdwg.mxu0
  %2856 = vmatpush.bf16.msra.mxu0 %v2794
  %2857 = vmatpush.bf16.msra.mxu0 %v2793
  %2858 = vmatpush.bf16.msra.mxu0 %v2792
  %2859 = vmatpush.bf16.msra.mxu0 %v2791
  %2860 = vmatpush.bf16.msra.mxu0 %v2790
  %2861 = vmatpush.bf16.msra.mxu0 %v2789
  %2862 = vmatpush.bf16.msra.mxu0 %v2788
  %2863 = vmatpush.bf16.msra.mxu0 %v2787
  %2864 = vmatmul.bf16.gmra.mxu0 %v2580
  %v2865 = vpop.f32.mrf.mxu0
  %v2866 = vadd.f32 %v2853, %v2865
  %v2867 = vpop.f32.mrf.mxu0
  %2868 = vdwg.mxu0
  %2869 = vmatpush.bf16.msra.mxu0 %v2802
  %2870 = vmatpush.bf16.msra.mxu0 %v2801
  %2871 = vmatpush.bf16.msra.mxu0 %v2800
  %2872 = vmatpush.bf16.msra.mxu0 %v2799
  %2873 = vmatpush.bf16.msra.mxu0 %v2798
  %2874 = vmatpush.bf16.msra.mxu0 %v2797
  %2875 = vmatpush.bf16.msra.mxu0 %v2796
  %2876 = vmatpush.bf16.msra.mxu0 %v2795
  %2877 = vmatmul.bf16.gmra.mxu0 %v2581
  %v2878 = vpop.f32.mrf.mxu0
  %v2879 = vadd.f32 %v2866, %v2878
  %v2880 = vpop.f32.mrf.mxu0
  %2881 = vdwg.mxu0
  %2882 = vmatpush.bf16.msra.mxu0 %v2810
  %2883 = vmatpush.bf16.msra.mxu0 %v2809
  %2884 = vmatpush.bf16.msra.mxu0 %v2808
  %2885 = vmatpush.bf16.msra.mxu0 %v2807
  %2886 = vmatpush.bf16.msra.mxu0 %v2806
  %2887 = vmatpush.bf16.msra.mxu0 %v2805
  %2888 = vmatpush.bf16.msra.mxu0 %v2804
  %2889 = vmatpush.bf16.msra.mxu0 %v2803
  %2890 = vmatmul.bf16.gmra.mxu0 %v2582
  %v2891 = vpop.f32.mrf.mxu0
  %v2892 = vadd.f32 %v2879, %v2891
  %v2893 = vpop.f32.mrf.mxu0
  %2894 = vdwg.mxu0
  %v2895 = vpack.c.bf16 %v2892, %v2892
  %2896 = vst [vmem:[%s7] sm:$0xf] %v2895
  // Predicated region
  $region30: #{qnetwork_forward.1} parent=0 // pred_check
    _
  $region31: #{qnetwork_forward.1} parent=0 // pred_check_branch
    %2898 = sbr.rel (0) target = $region33
  $region32: #{qnetwork_forward.1} parent=0 // pred_region
    _
  $region33: #{qnetwork_forward.1} parent=0 // pred_fallthru
    _
  // Predicated region
  $region34: #{qnetwork_forward.1} parent=0 // pred_check
    _
  $region35: #{qnetwork_forward.1} parent=0 // pred_check_branch
    %2900 = sbr.rel (0) target = $region37
  $region36: #{qnetwork_forward.1} parent=0 // pred_region
    _
  $region37: #{qnetwork_forward.1} parent=0 // pred_fallthru
    _

</llo_original>
